<compile_context>
chip_gen: v6e
topology: v6e:2x2x1
jax: 0.10.0
libtpu: 0.0.40
codegen_flags: <defaults>
</compile_context>

<pallas_src>
import jax
import jax.numpy as jnp
from jax import lax
from jax.experimental import pallas as pl
from jax.experimental.pallas import tpu as pltpu


def _encoder_kernel(chunks_ref, tail_ref, wl_ref, wr_ref, o_ref):
    # chunks_ref: (1, R, H)   chunk rows [row0, row0 + R), chunk c = mixture[c*H:(c+1)*H]
    # tail_ref:   (1, >=1, H) small block starting at chunk row row0 + R (only row 0 used)
    # wl_ref:     (N, H)      conv weight[:, 0, :H]
    # wr_ref:     (N, H)      conv weight[:, 0, H:]
    # o_ref:      (1, N, O)   output frames [row0, row0 + O), O <= R
    chunks = chunks_ref[0]                                   # (R, H)
    wl = wl_ref[...]                                         # (N, H)
    wr = wr_ref[...]                                         # (N, H)
    n_out = o_ref.shape[2]

    dn = (((1,), (1,)), ((), ()))                            # contract H on both operands
    # left[:, t]  = wl @ chunks[t]   -> first-half-window contribution of frame t
    # right[:, t] = wr @ chunks[t]   -> second-half contribution, belongs to frame t-1
    left = lax.dot_general(wl, chunks, dn,
                           preferred_element_type=jnp.float32,
                           precision=lax.Precision.HIGHEST)  # (N, R)
    right = lax.dot_general(wr, chunks, dn,
                            preferred_element_type=jnp.float32,
                            precision=lax.Precision.HIGHEST)  # (N, R)

    # Frame R-1 of this block needs the first chunk row of the NEXT block (tail).
    tail_row = tail_ref[0][0:1, :]                           # (1, H)
    boundary = jnp.sum(wr * tail_row, axis=1, keepdims=True)  # (N, 1), VPU+XLU

    # Shift the second-half contributions one frame left and append the boundary column.
    right = jnp.concatenate([right[:, 1:], boundary], axis=1)  # (N, R)

    out = jnp.maximum(left + right, 0.0)                     # ReLU in f32
    o_ref[0] = out[:, :n_out].astype(o_ref.dtype)


def encoder_forward(mixture, weight, L, *, tk=512, out_dtype=None):
    """
    Args:
        mixture: [M, T] float32 signal.
        weight:  [N, 1, L] float32 Conv1d weight (PyTorch layout).
        L:       window length (stride = L // 2).
        tk:      target K-tile (multiple of 128) used when K is large.
        out_dtype: output dtype (default mixture.dtype; bf16 halves output HBM traffic).
    Returns:
        mixture_w: [M, N, K] with K = (T - L) // (L//2) + 1 = 2T/L - 1.
    """
    M, T = mixture.shape
    N = weight.shape[0]
    assert L % 2 == 0, "L must be even"
    H = L // 2
    assert T % H == 0 and T >= L, "T must be a multiple of L//2 and >= L"
    # TODO(synk): fully general T (PyTorch silently drops trailing samples) would need a trim.
    C = T // H                      # non-overlapping half-window chunks
    K = C - 1                       # output frames
    out_dtype = mixture.dtype if out_dtype is None else out_dtype

    # Free reshape: NO overlapping frames array is written to HBM.
    chunks = mixture.reshape(M, C, H)                         # [M, C, H]
    w2 = weight[:, 0, :]                                      # [N, L]
    wl, wr = w2[:, :H], w2[:, H:]                             # [N, H] each (tiny, one-time)

    if K >= 128:
        # K-tiled path: TK multiple of 128 (lane-dense output stores), TK <= K.
        TK = max(128, (min(tk, K) // 128) * 128)
        J = pl.cdiv(K, TK)
        tk8 = TK // 8
        last8 = (C - 1) // 8        # last valid 8-row block index of `chunks`
        chunk_spec = pl.BlockSpec((1, TK, H), lambda m, j: (m, j, 0))
        tail_spec = pl.BlockSpec(
            (1, 8, H), lambda m, j: (m, jnp.minimum((j + 1) * tk8, last8), 0))
        out_spec = pl.BlockSpec((1, N, TK), lambda m, j: (m, 0, j))
    else:
        # Small-K path: one block == full dims (no alignment constraints).
        J = 1
        tail_rows = min(8, C)       # content is unused (boundary column is sliced off)
        chunk_spec = pl.BlockSpec((1, C, H), lambda m, j: (m, 0, 0))
        tail_spec = pl.BlockSpec((1, tail_rows, H), lambda m, j: (m, 0, 0))
        out_spec = pl.BlockSpec((1, N, K), lambda m, j: (m, 0, 0))

    return pl.pallas_call(
        _encoder_kernel,
        out_shape=jax.ShapeDtypeStruct((M, N, K), out_dtype),
        grid_spec=pltpu.PrefetchScalarGridSpec(
            num_scalar_prefetch=0,
            grid=(M, J),
            in_specs=[
                chunk_spec,                                   # chunks (main block)
                tail_spec,                                    # same array, tiny tail block
                pl.BlockSpec((N, H), lambda m, j: (0, 0)),    # wl, resident
                pl.BlockSpec((N, H), lambda m, j: (0, 0)),    # wr, resident
            ],
            out_specs=out_spec,
        ),
        compiler_params=pltpu.CompilerParams(
            dimension_semantics=("parallel", "parallel")),
    )(chunks, chunks, wl, wr)


def encoder_reference(mixture, weight, L):
    """Pure-JAX reference (conv as framed matmul) for validation."""
    M, T = mixture.shape
    N = weight.shape[0]
    H = L // 2
    K = (T - L) // H + 1
    idx = jnp.arange(K)[:, None] * H + jnp.arange(L)[None, :]   # [K, L]
    frames = mixture[:, idx]                                    # [M, K, L]
    w = weight[:, 0, :]                                         # [N, L]
    out = jnp.einsum("mkl,nl->mnk", frames, w,
                     precision=lax.Precision.HIGHEST)
    return jnp.maximum(out, 0.0)


if __name__ == "__main__":
    key = jax.random.PRNGKey(0)
    # 1) small case (single-block path), 2) larger case exercising the K-tiled path
    #    (K = 255 -> two 128-wide K tiles, cross-tile tail row, partial last block).
    for (M, T, L, N) in [(2, 64, 8, 32), (2, 1024, 8, 32)]:
        key, k_mix, k_w = jax.random.split(key, 3)
        mixture = jax.random.normal(k_mix, (M, T), dtype=jnp.float32)
        weight = jax.random.normal(k_w, (N, 1, L), dtype=jnp.float32) * 0.1

        out = jax.block_until_ready(encoder_forward(mixture, weight, L))
        ref = encoder_reference(mixture, weight, L)

        K = 2 * T // L - 1
        assert out.shape == (M, N, K), out.shape
        assert jnp.allclose(out, ref, atol=1e-4, rtol=1e-4), (
            f"mismatch vs reference at M={M} T={T} L={L} N={N}")

    print("KERNEL_OK")
</pallas_src>

<mosaic_0001>
module attributes {stable_mosaic.version = 11 : i64} {
  func.func @_encoder_kernel(%arg0: i32, %arg1: i32, %arg2: memref<1x16x4xf32, #tpu.memory_space<vmem>>, %arg3: memref<1x8x4xf32, #tpu.memory_space<vmem>>, %arg4: memref<32x4xf32, #tpu.memory_space<vmem>>, %arg5: memref<32x4xf32, #tpu.memory_space<vmem>>, %arg6: memref<1x32x15xf32, #tpu.memory_space<vmem>>) attributes {dimension_semantics = [#tpu.dimension_semantics<parallel>, #tpu.dimension_semantics<parallel>], iteration_bounds = array<i64: 2, 1>, scalar_prefetch = 0 : i64, scratch_operands = 0 : i64, tpu.core_type = #tpu.core_type<tc>, window_params = [{transform_indices = @transform_0, window_bounds = array<i64: 1, 16, 4>}, {transform_indices = @transform_1, window_bounds = array<i64: 1, 8, 4>}, {pipeline_mode = #tpu.pipeline_mode<synchronous>, transform_indices = @transform_2, window_bounds = array<i64: 32, 4>}, {pipeline_mode = #tpu.pipeline_mode<synchronous>, transform_indices = @transform_3, window_bounds = array<i64: 32, 4>}, {transform_indices = @transform_4, window_bounds = array<i64: 1, 32, 15>}]} {
    %c0 = arith.constant 0 : index
    %c0_0 = arith.constant 0 : index
    %c0_1 = arith.constant 0 : index
    %0 = vector.load %arg2[%c0, %c0_0, %c0_1] : memref<1x16x4xf32, #tpu.memory_space<vmem>>, vector<1x16x4xf32>
    %1 = vector.shape_cast %0 : vector<1x16x4xf32> to vector<16x4xf32>
    %c0_2 = arith.constant 0 : index
    %c0_3 = arith.constant 0 : index
    %2 = vector.load %arg4[%c0_2, %c0_3] : memref<32x4xf32, #tpu.memory_space<vmem>>, vector<32x4xf32>
    %c0_4 = arith.constant 0 : index
    %c0_5 = arith.constant 0 : index
    %3 = vector.load %arg5[%c0_4, %c0_5] : memref<32x4xf32, #tpu.memory_space<vmem>>, vector<32x4xf32>
    %cst = arith.constant dense<0.000000e+00> : vector<32x16xf32>
    %4 = tpu.matmul %2, %1, %cst {dimension_numbers = #tpu.dot_dimension_numbers<[1], [1], [0], [0], [0, 0, 1, 0], [], []>, precision = #tpu.contract_precision<fp32>} : vector<32x4xf32>, vector<16x4xf32>, vector<32x16xf32> -> vector<32x16xf32>
    %cst_6 = arith.constant dense<0.000000e+00> : vector<32x16xf32>
    %5 = tpu.matmul %3, %1, %cst_6 {dimension_numbers = #tpu.dot_dimension_numbers<[1], [1], [0], [0], [0, 0, 1, 0], [], []>, precision = #tpu.contract_precision<fp32>} : vector<32x4xf32>, vector<16x4xf32>, vector<32x16xf32> -> vector<32x16xf32>
    %c0_7 = arith.constant 0 : index
    %c0_8 = arith.constant 0 : index
    %c0_9 = arith.constant 0 : index
    %6 = vector.load %arg3[%c0_7, %c0_8, %c0_9] : memref<1x8x4xf32, #tpu.memory_space<vmem>>, vector<1x8x4xf32>
    %7 = vector.shape_cast %6 : vector<1x8x4xf32> to vector<8x4xf32>
    %8 = vector.extract_strided_slice %7 {offsets = [0, 0], sizes = [1, 4], strides = [1, 1]} : vector<8x4xf32> to vector<1x4xf32>
    %9 = vector.broadcast %8 : vector<1x4xf32> to vector<32x4xf32>
    %10 = arith.mulf %3, %9 : vector<32x4xf32>
    %cst_10 = arith.constant dense<0.000000e+00> : vector<32xf32>
    %11 = vector.multi_reduction <add>, %10, %cst_10 [1] : vector<32x4xf32> to vector<32xf32>
    %12 = vector.shape_cast %11 : vector<32xf32> to vector<32x1xf32>
    %13 = vector.extract_strided_slice %5 {offsets = [0, 1], sizes = [32, 15], strides = [1, 1]} : vector<32x16xf32> to vector<32x15xf32>
    %14 = tpu.concatenate %13, %12 in 1 : vector<32x15xf32>, vector<32x1xf32> -> vector<32x16xf32>
    %15 = arith.addf %4, %14 : vector<32x16xf32>
    %cst_11 = arith.constant 0.000000e+00 : f32
    %16 = vector.broadcast %cst_11 : f32 to vector<32x16xf32>
    %17 = arith.maximumf %15, %16 : vector<32x16xf32>
    %18 = vector.extract_strided_slice %17 {offsets = [0, 0], sizes = [32, 15], strides = [1, 1]} : vector<32x16xf32> to vector<32x15xf32>
    %c0_12 = arith.constant 0 : index
    %c0_13 = arith.constant 0 : index
    %c0_14 = arith.constant 0 : index
    %19 = vector.load %arg6[%c0_12, %c0_13, %c0_14] : memref<1x32x15xf32, #tpu.memory_space<vmem>>, vector<1x32x15xf32>
    %20 = vector.shape_cast %19 : vector<1x32x15xf32> to vector<32x15xf32>
    %21 = vector.shape_cast %18 : vector<32x15xf32> to vector<1x32x15xf32>
    tpu.vector_store %arg6[%c0_12, %c0_13, %c0_14], %21 {strides = array<i32>} : memref<1x32x15xf32, #tpu.memory_space<vmem>>, vector<1x32x15xf32>,
    return
  }
  func.func @transform_0(%arg0: i32, %arg1: i32) -> (i32, i32, i32) {
    %c0_i32 = arith.constant 0 : i32
    %c0_i32_0 = arith.constant 0 : i32
    %c0_i32_1 = arith.constant 0 : i32
    return %arg0, %c0_i32, %c0_i32_0 : i32, i32, i32
  }
  func.func @transform_1(%arg0: i32, %arg1: i32) -> (i32, i32, i32) {
    %c0_i32 = arith.constant 0 : i32
    %c0_i32_0 = arith.constant 0 : i32
    %c0_i32_1 = arith.constant 0 : i32
    return %arg0, %c0_i32, %c0_i32_0 : i32, i32, i32
  }
  func.func @transform_2(%arg0: i32, %arg1: i32) -> (i32, i32) {
    %c0_i32 = arith.constant 0 : i32
    %c0_i32_0 = arith.constant 0 : i32
    %c0_i32_1 = arith.constant 0 : i32
    return %c0_i32, %c0_i32_0 : i32, i32
  }
  func.func @transform_3(%arg0: i32, %arg1: i32) -> (i32, i32) {
    %c0_i32 = arith.constant 0 : i32
    %c0_i32_0 = arith.constant 0 : i32
    %c0_i32_1 = arith.constant 0 : i32
    return %c0_i32, %c0_i32_0 : i32, i32
  }
  func.func @transform_4(%arg0: i32, %arg1: i32) -> (i32, i32, i32) {
    %c0_i32 = arith.constant 0 : i32
    %c0_i32_0 = arith.constant 0 : i32
    %c0_i32_1 = arith.constant 0 : i32
    return %arg0, %c0_i32, %c0_i32_0 : i32, i32, i32
  }
}

</mosaic_0001>

<llo_original>
// kernel: tpu_custom_call.1
$region0: #{tpu_custom_call.1}
  #allocation0 [shape = 'u32[]', space=smem, size = 0x4, offset = 0x4, fixed_abs, tag = 'smem constant byte address 0x4 - core index']
  #allocation1 [shape = 'u32[144,128]{1,0:T(1,128)}', space=vmem, size = 0x12000, scoped, tag = 'internal scratch']
  %s0 = inlined_call_operand.vmem [shape: f32[2,16,4], index: 0, kind: input, shape index: {}]
  %s1 = inlined_call_operand.vmem [shape: f32[2,16,4], index: 1, kind: input, shape index: {}]
  %s2 = inlined_call_operand.vmem [shape: f32[32,4], index: 2, kind: input, shape index: {}]
  %s3 = inlined_call_operand.vmem [shape: f32[32,4], index: 3, kind: input, shape index: {}]
  %s4 = inlined_call_operand.vmem [shape: f32[2,32,15], index: 4, kind: output, shape index: {}]
  %s5 = sld [smem:[#allocation0]]
  $region49: #{tpu_custom_call.1} parent=0
    _
  %s7 = ssub.s32 1, %s5
  %s8 = scalar_select 0, %s7, %s5
  loop: start=0, step=1, limit=4
  $region2: #{tpu_custom_call.1} parent=0 // loop_pre_header
    _
  $region3: #{tpu_custom_call.1} parent=0 // loop_header
    %s10 = sphi 0, %s14
    %p11 = scmp.ge.s32.totalorder %s10, 4
    %s17 = sphi 0, %s29
    %s18 = sphi 0, %s25
    %s19 = sphi 0, %s17
    %s20 = sphi 0, %s18
    %s21 = sphi 0, %s19
    %s22 = sphi 0, %s20
    %s32 = sphi 0, %s34
    %s35 = sphi 0, %s32
    %s36 = sphi 0, %s35
    %s52 = sphi 0, %s36
    %s58 = sphi 0, %s60
    %s61 = sphi 0, %s58
    %s62 = sphi 0, %s61
    %s78 = sphi 0, %s62
    %s82 = sphi 0, %s82
    %s84 = sphi 0, %s82
    %s85 = sphi 0, %s84
    %s99 = sphi 0, %s85
    %s103 = sphi 0, %s103
    %s105 = sphi 0, %s103
    %s106 = sphi 0, %s105
    %s120 = sphi 0, %s106
    %s126 = sphi 0, %s128
    %s129 = sphi 0, %s126
    %s130 = sphi 0, %s129
    %s146 = sphi 0, %s130
  $region4: #{tpu_custom_call.1} parent=0 // loop_header_branch
    %13 = sbr.rel (%p11) target = $region8
  $region5: #{tpu_custom_call.1} parent=0 // loop_body
    %s15 = ssub.s32 %s10, 1
    %s16 = ssub.s32 %s10, 2
    %s23 = sadd.s32 1, %s18
    %p24 = scmp.ge.s32.totalorder %s23, 1
    %s25 = scalar_select %p24, 0, %s23
    %s26 = sadd.s32 1, %s17
    %s27 = scalar_select %p24, %s26, %s17
    %p28 = scmp.ge.s32.totalorder %s27, 2
    %s29 = scalar_select %p28, 0, %s27
    %s30 = ssub.s32 %s17, %s29
    %p31 = scmp.eq.s32.totalorder %s30, 0
    %s33 = sadd.s32 %s32, 1
    %s34 = scalar_select %p31, %s32, %s33
    %p37 = pneg %p31
    %p38 = scmp.eq.s32.totalorder %s10, 1
    %p39 = por %p37, %p38
    %p40 = scmp.ne.s32.totalorder %s32, %s35
    %p41 = scmp.eq.s32.totalorder %s10, 0
    %p42 = por %p40, %p41
    %p43 = scmp.ne.s32.totalorder %s32, %s35
    %p44 = scmp.eq.s32.totalorder %s15, 1
    %p45 = por %p43, %p44
    %p46 = scmp.ne.s32.totalorder %s35, %s36
    %p47 = scmp.eq.s32.totalorder %s15, 0
    %p48 = por %p46, %p47
    %p49 = scmp.ne.s32.totalorder %s35, %s36
    %p50 = scmp.eq.s32.totalorder %s16, 1
    %p51 = por %p49, %p50
    %p53 = scmp.ne.s32.totalorder %s36, %s52
    %p54 = scmp.eq.s32.totalorder %s16, 0
    %p55 = por %p53, %p54
    %s56 = ssub.s32 %s17, %s29
    %p57 = scmp.eq.s32.totalorder %s56, 0
    %s59 = sadd.s32 %s58, 1
    %s60 = scalar_select %p57, %s58, %s59
    %p63 = pneg %p57
    %p64 = scmp.eq.s32.totalorder %s10, 1
    %p65 = por %p63, %p64
    %p66 = scmp.ne.s32.totalorder %s58, %s61
    %p67 = scmp.eq.s32.totalorder %s10, 0
    %p68 = por %p66, %p67
    %p69 = scmp.ne.s32.totalorder %s58, %s61
    %p70 = scmp.eq.s32.totalorder %s15, 1
    %p71 = por %p69, %p70
    %p72 = scmp.ne.s32.totalorder %s61, %s62
    %p73 = scmp.eq.s32.totalorder %s15, 0
    %p74 = por %p72, %p73
    %p75 = scmp.ne.s32.totalorder %s61, %s62
    %p76 = scmp.eq.s32.totalorder %s16, 1
    %p77 = por %p75, %p76
    %p79 = scmp.ne.s32.totalorder %s62, %s78
    %p80 = scmp.eq.s32.totalorder %s16, 0
    %p81 = por %p79, %p80
    %s83 = sadd.s32 %s82, 1
    %p86 = scmp.eq.s32.totalorder %s10, 1
    %p87 = scmp.ne.s32.totalorder %s82, %s84
    %p88 = scmp.eq.s32.totalorder %s10, 0
    %p89 = por %p87, %p88
    %p90 = scmp.ne.s32.totalorder %s82, %s84
    %p91 = scmp.eq.s32.totalorder %s15, 1
    %p92 = por %p90, %p91
    %p93 = scmp.ne.s32.totalorder %s84, %s85
    %p94 = scmp.eq.s32.totalorder %s15, 0
    %p95 = por %p93, %p94
    %p96 = scmp.ne.s32.totalorder %s84, %s85
    %p97 = scmp.eq.s32.totalorder %s16, 1
    %p98 = por %p96, %p97
    %p100 = scmp.ne.s32.totalorder %s85, %s99
    %p101 = scmp.eq.s32.totalorder %s16, 0
    %p102 = por %p100, %p101
    %s104 = sadd.s32 %s103, 1
    %p107 = scmp.eq.s32.totalorder %s10, 1
    %p108 = scmp.ne.s32.totalorder %s103, %s105
    %p109 = scmp.eq.s32.totalorder %s10, 0
    %p110 = por %p108, %p109
    %p111 = scmp.ne.s32.totalorder %s103, %s105
    %p112 = scmp.eq.s32.totalorder %s15, 1
    %p113 = por %p111, %p112
    %p114 = scmp.ne.s32.totalorder %s105, %s106
    %p115 = scmp.eq.s32.totalorder %s15, 0
    %p116 = por %p114, %p115
    %p117 = scmp.ne.s32.totalorder %s105, %s106
    %p118 = scmp.eq.s32.totalorder %s16, 1
    %p119 = por %p117, %p118
    %p121 = scmp.ne.s32.totalorder %s106, %s120
    %p122 = scmp.eq.s32.totalorder %s16, 0
    %p123 = por %p121, %p122
    %s124 = ssub.s32 %s17, %s29
    %p125 = scmp.eq.s32.totalorder %s124, 0
    %s127 = sadd.s32 %s126, 1
    %s128 = scalar_select %p125, %s126, %s127
    %p131 = pneg %p125
    %p132 = scmp.eq.s32.totalorder %s10, 1
    %p133 = por %p131, %p132
    %p134 = scmp.ne.s32.totalorder %s126, %s129
    %p135 = scmp.eq.s32.totalorder %s10, 0
    %p136 = por %p134, %p135
    %p137 = scmp.ne.s32.totalorder %s126, %s129
    %p138 = scmp.eq.s32.totalorder %s15, 1
    %p139 = por %p137, %p138
    %p140 = scmp.ne.s32.totalorder %s129, %s130
    %p141 = scmp.eq.s32.totalorder %s15, 0
    %p142 = por %p140, %p141
    %p143 = scmp.ne.s32.totalorder %s129, %s130
    %p144 = scmp.eq.s32.totalorder %s16, 1
    %p145 = por %p143, %p144
    %p147 = scmp.ne.s32.totalorder %s130, %s146
    %p148 = scmp.eq.s32.totalorder %s16, 0
    %p149 = por %p147, %p148
    %p150 = scmp.le.s32.totalorder 1, %s10
    %p151 = scmp.lt.s32.totalorder %s10, 3
    %p152 = pnand %p150, %p151
    %p153 = pneg %p152
    // Predicated region
    $region9: #{tpu_custom_call.1} parent=5 // pred_check
      _
    $region10: #{tpu_custom_call.1} parent=5 // pred_check_branch
      %155 = sbr.rel (%p152) target = $region12
    $region11: #{tpu_custom_call.1} parent=5 // pred_region
      %s156 = ssub.s32 %s10, 1
      // Predicated region
      $region13: #{tpu_custom_call.1} parent=11 // pred_check
        %p157 = pneg %p95
      $region14: #{tpu_custom_call.1} parent=11 // pred_check_branch
        %159 = sbr.rel (%p157) target = $region16
      $region15: #{tpu_custom_call.1} parent=11 // pred_region
        _
      $region16: #{tpu_custom_call.1} parent=11 // pred_fallthru
        _
      // Predicated region
      $region17: #{tpu_custom_call.1} parent=11 // pred_check
        %p160 = pneg %p116
      $region18: #{tpu_custom_call.1} parent=11 // pred_check_branch
        %162 = sbr.rel (%p160) target = $region20
      $region19: #{tpu_custom_call.1} parent=11 // pred_region
        _
      $region20: #{tpu_custom_call.1} parent=11 // pred_fallthru
        _
    $region12: #{tpu_custom_call.1} parent=5 // pred_fallthru
      _
    %p163 = scmp.lt.s32.totalorder %s10, 2
    // Predicated region
    $region21: #{tpu_custom_call.1} parent=5 // pred_check
      %p164 = pneg %p163
    $region22: #{tpu_custom_call.1} parent=5 // pred_check_branch
      %166 = sbr.rel (%p164) target = $region24
    $region23: #{tpu_custom_call.1} parent=5 // pred_region
      // Predicated region
      $region25: #{tpu_custom_call.1} parent=23 // pred_check
        %p167 = pneg %p42
      $region26: #{tpu_custom_call.1} parent=23 // pred_check_branch
        %169 = sbr.rel (%p167) target = $region28
      $region27: #{tpu_custom_call.1} parent=23 // pred_region
        %p170 = scmp.lt.s32.totalorder %s17, 1
        %s171 = scalar_select %p170, %s17, 1
        %s172 = smul.addr %s171, 2
        %s173 = smul.addr %s172, 8
        %s174 = scalar_lea.vmem %s0, %s173
      $region28: #{tpu_custom_call.1} parent=23 // pred_fallthru
        _
      // Predicated region
      $region29: #{tpu_custom_call.1} parent=23 // pred_check
        %p175 = pneg %p68
      $region30: #{tpu_custom_call.1} parent=23 // pred_check_branch
        %177 = sbr.rel (%p175) target = $region32
      $region31: #{tpu_custom_call.1} parent=23 // pred_region
        %p178 = scmp.lt.s32.totalorder %s17, 1
        %s179 = scalar_select %p178, %s17, 1
        %s180 = smul.addr %s179, 2
        %s181 = smul.addr %s180, 8
        %s182 = scalar_lea.vmem %s1, %s181
      $region32: #{tpu_custom_call.1} parent=23 // pred_fallthru
        _
    $region24: #{tpu_custom_call.1} parent=5 // pred_fallthru
      _
    %p183 = scmp.le.s32.totalorder 1, %s10
    %p184 = scmp.lt.s32.totalorder %s10, 3
    %p185 = pnand %p183, %p184
    %p186 = pneg %p185
    // Predicated region
    $region33: #{tpu_custom_call.1} parent=5 // pred_check
      _
    $region34: #{tpu_custom_call.1} parent=5 // pred_check_branch
      %188 = sbr.rel (%p185) target = $region36
    $region35: #{tpu_custom_call.1} parent=5 // pred_region
      %s189 = ssub.s32 %s10, 1
      %p190 = scmp.lt.s32.totalorder %s19, 1
      %s191 = scalar_select %p190, %s19, 1
      %s192 = smul.addr %s191, 2
      %s193 = smul.addr %s192, 8
      %s194 = scalar_lea.vmem %s0, %s193
      %p195 = pneg %p48
      %p196 = pneg %p45
      %p197 = scmp.lt.s32.totalorder %s19, 1
      %s198 = scalar_select %p197, %s19, 1
      %s199 = smul.addr %s198, 2
      %s200 = smul.addr %s199, 8
      %s201 = scalar_lea.vmem %s1, %s200
      %p202 = pneg %p74
      %p203 = pneg %p71
      %p204 = pneg %p95
      %p205 = pneg %p92
      %p206 = pneg %p116
      %p207 = pneg %p113
      %p208 = pneg %p142
      %p209 = pneg %p139
      %p210 = scmp.lt.s32.totalorder %s19, 1
      %s211 = scalar_select %p210, %s19, 1
      %s212 = smul.addr %s211, 4
      %s213 = smul.addr %s212, 8
      %s214 = scalar_lea.vmem %s4, %s213
      %p215 = scmp.lt.s32.totalorder %s19, 1
      %s216 = scalar_select %p215, %s19, 1
      %s217 = smul.addr %s216, 2
      %s218 = smul.addr %s217, 8
      %s219 = scalar_lea.vmem %s0, %s218
      %p220 = scmp.lt.s32.totalorder %s19, 1
      %s221 = scalar_select %p220, %s19, 1
      %s222 = smul.addr %s221, 2
      %s223 = smul.addr %s222, 8
      %s224 = scalar_lea.vmem %s1, %s223
      %p225 = scmp.lt.s32.totalorder %s19, 1
      %s226 = scalar_select %p225, %s19, 1
      %s227 = smul.addr %s226, 4
      %s228 = smul.addr %s227, 8
      %s229 = scalar_lea.vmem %s4, %s228
      %v230 = vld [vmem:[%s219] sm:$0xff]
      %v231 = vld [vmem:[%s219 + $0x8] sm:$0xff]
      %v232 = vld [vmem:[%s2] sm:$0xff]
      %v233 = vld [vmem:[%s2 + $0x8] sm:$0xff]
      %v234 = vld [vmem:[%s2 + $0x10] sm:$0xff]
      %v235 = vld [vmem:[%s2 + $0x18] sm:$0xff]
      %v236 = vld [vmem:[%s3] sm:$0xff]
      %v237 = vld [vmem:[%s3 + $0x8] sm:$0xff]
      %v238 = vld [vmem:[%s3 + $0x10] sm:$0xff]
      %v239 = vld [vmem:[%s3 + $0x18] sm:$0xff]
      %vm240 = vcmask 31744
      %v242 = vsel %vm240, %v236, 0
      %v245 = vsel %vm240, %v237, 0
      %v248 = vsel %vm240, %v238, 0
      %v251 = vsel %vm240, %v239, 0
      %v254 = vsel %vm240, %v230, 0
      %v257 = vsel %vm240, %v231, 0
      %259 = vmatprep.subr.mxu0 0.0
      %260 = vmatpush1.xpose.msra.mxu0 0.0
      %261 = vmatprep.subr.mxu0 0.0
      %262 = vmatpush1.xpose.msra.mxu0 0.0
      %263 = vmatprep.subr.mxu0 0.0
      %264 = vmatpush1.xpose.msra.mxu0 0.0
      %265 = vmatprep.subr.mxu0 0.0
      %266 = vmatpush1.xpose.msra.mxu0 0.0
      %267 = vmatprep.subr.mxu0 0.0
      %268 = vmatpush1.xpose.msra.mxu0 0.0
      %269 = vmatprep.subr.mxu0 0.0
      %270 = vmatpush1.xpose.msra.mxu0 0.0
      %271 = vmatprep.subr.mxu0 0.0
      %272 = vmatpush1.xpose.msra.mxu0 0.0
      %273 = vmatprep.subr.mxu0 0.0
      %274 = vmatpush1.xpose.msra.mxu0 0.0
      %275 = vmatprep.subr.mxu0 0.0
      %276 = vmatpush1.xpose.msra.mxu0 0.0
      %277 = vmatprep.subr.mxu0 0.0
      %278 = vmatpush1.xpose.msra.mxu0 0.0
      %279 = vmatprep.subr.mxu0 0.0
      %280 = vmatpush1.xpose.msra.mxu0 0.0
      %281 = vmatprep.subr.mxu0 0.0
      %282 = vmatpush1.xpose.msra.mxu0 0.0
      %283 = vmatprep.subr.mxu0 0.0
      %284 = vmatpush1.xpose.msra.mxu0 0.0
      %285 = vmatprep.subr.mxu0 0.0
      %286 = vmatpush1.xpose.msra.mxu0 0.0
      %287 = vmatprep.subr.mxu0 0.0
      %v288 = vand.u32 %v257, 4294901760
      %289 = vmatpush1.xpose.msra.mxu0 %v288
      %290 = vmatprep.subr.mxu0 0.0
      %v291 = vand.u32 %v254, 4294901760
      %292 = vmatpush1.xpose.msra.mxu0 %v291
      %293 = vmatprep.subr.mxu0 0.0
      %294 = vmatpush2.xpose.msra.mxu0 0.0
      %295 = vmatprep.subr.mxu0 0.0
      %296 = vmatpush2.xpose.msra.mxu0 0.0
      %297 = vmatprep.subr.mxu0 0.0
      %298 = vmatpush2.xpose.msra.mxu0 0.0
      %299 = vmatprep.subr.mxu0 0.0
      %300 = vmatpush2.xpose.msra.mxu0 0.0
      %301 = vmatprep.subr.mxu0 0.0
      %302 = vmatpush2.xpose.msra.mxu0 0.0
      %303 = vmatprep.subr.mxu0 0.0
      %304 = vmatpush2.xpose.msra.mxu0 0.0
      %305 = vmatprep.subr.mxu0 0.0
      %306 = vmatpush2.xpose.msra.mxu0 0.0
      %307 = vmatprep.subr.mxu0 0.0
      %308 = vmatpush2.xpose.msra.mxu0 0.0
      %309 = vmatprep.subr.mxu0 0.0
      %310 = vmatpush2.xpose.msra.mxu0 0.0
      %311 = vmatprep.subr.mxu0 0.0
      %312 = vmatpush2.xpose.msra.mxu0 0.0
      %313 = vmatprep.subr.mxu0 0.0
      %314 = vmatpush2.xpose.msra.mxu0 0.0
      %315 = vmatprep.subr.mxu0 0.0
      %316 = vmatpush2.xpose.msra.mxu0 0.0
      %317 = vmatprep.subr.mxu0 0.0
      %318 = vmatpush2.xpose.msra.mxu0 0.0
      %319 = vmatprep.subr.mxu0 0.0
      %320 = vmatpush2.xpose.msra.mxu0 0.0
      %321 = vmatprep.subr.mxu0 0.0
      %322 = vmatpush2.xpose.msra.mxu0 0.0
      %323 = vmatprep.subr.mxu0 0.0
      %324 = vmatpush2.xpose.msra.mxu0 0.0
      %325 = vmatprep.mubr.f32.mxu0 0.0
      %v326 = vand.u32 %v242, 4294901760
      %v327 = vsub.f32 %v242, %v326
      %v328 = vand.u32 %v327, 4294901760
      %v329 = vsub.f32 %v327, %v328
      %v330 = vand.u32 %v329, 4294901760
      %331 = vmatmul.mubr.f32.gmra.mxu0 %v330
      %v332 = vpop.f32.mrf.mxu0
      %v333 = vadd.f32 0.0, %v332
      %v334 = vpop.f32.mrf.mxu0
      %335 = vmatprep.mubr.f32.mxu0 0.0
      %v336 = vand.u32 %v245, 4294901760
      %v337 = vsub.f32 %v245, %v336
      %v338 = vand.u32 %v337, 4294901760
      %v339 = vsub.f32 %v337, %v338
      %v340 = vand.u32 %v339, 4294901760
      %341 = vmatmul.mubr.f32.gmra.mxu0 %v340
      %v342 = vpop.f32.mrf.mxu0
      %v343 = vadd.f32 0.0, %v342
      %v344 = vpop.f32.mrf.mxu0
      %345 = vmatprep.mubr.f32.mxu0 0.0
      %v346 = vand.u32 %v248, 4294901760
      %v347 = vsub.f32 %v248, %v346
      %v348 = vand.u32 %v347, 4294901760
      %v349 = vsub.f32 %v347, %v348
      %v350 = vand.u32 %v349, 4294901760
      %351 = vmatmul.mubr.f32.gmra.mxu0 %v350
      %v352 = vpop.f32.mrf.mxu0
      %v353 = vadd.f32 0.0, %v352
      %v354 = vpop.f32.mrf.mxu0
      %355 = vmatprep.mubr.f32.mxu0 0.0
      %v356 = vand.u32 %v251, 4294901760
      %v357 = vsub.f32 %v251, %v356
      %v358 = vand.u32 %v357, 4294901760
      %v359 = vsub.f32 %v357, %v358
      %v360 = vand.u32 %v359, 4294901760
      %361 = vmatmul.mubr.f32.gmra.mxu0 %v360
      %v362 = vpop.f32.mrf.mxu0
      %v363 = vadd.f32 0.0, %v362
      %v364 = vpop.f32.mrf.mxu0
      %365 = vdwg.mxu0
      %366 = vmatprep.subr.mxu0 0.0
      %367 = vmatpush1.xpose.msra.mxu0 0.0
      %368 = vmatprep.subr.mxu0 0.0
      %369 = vmatpush1.xpose.msra.mxu0 0.0
      %370 = vmatprep.subr.mxu0 0.0
      %371 = vmatpush1.xpose.msra.mxu0 0.0
      %372 = vmatprep.subr.mxu0 0.0
      %373 = vmatpush1.xpose.msra.mxu0 0.0
      %374 = vmatprep.subr.mxu0 0.0
      %375 = vmatpush1.xpose.msra.mxu0 0.0
      %376 = vmatprep.subr.mxu0 0.0
      %377 = vmatpush1.xpose.msra.mxu0 0.0
      %378 = vmatprep.subr.mxu0 0.0
      %379 = vmatpush1.xpose.msra.mxu0 0.0
      %380 = vmatprep.subr.mxu0 0.0
      %381 = vmatpush1.xpose.msra.mxu0 0.0
      %382 = vmatprep.subr.mxu0 0.0
      %383 = vmatpush1.xpose.msra.mxu0 0.0
      %384 = vmatprep.subr.mxu0 0.0
      %385 = vmatpush1.xpose.msra.mxu0 0.0
      %386 = vmatprep.subr.mxu0 0.0
      %387 = vmatpush1.xpose.msra.mxu0 0.0
      %388 = vmatprep.subr.mxu0 0.0
      %389 = vmatpush1.xpose.msra.mxu0 0.0
      %390 = vmatprep.subr.mxu0 0.0
      %391 = vmatpush1.xpose.msra.mxu0 0.0
      %392 = vmatprep.subr.mxu0 0.0
      %393 = vmatpush1.xpose.msra.mxu0 0.0
      %394 = vmatprep.subr.mxu0 0.0
      %v395 = vand.u32 %v257, 4294901760
      %v396 = vsub.f32 %v257, %v395
      %v397 = vand.u32 %v396, 4294901760
      %v398 = vsub.f32 %v396, %v397
      %v399 = vand.u32 %v398, 4294901760
      %400 = vmatpush1.xpose.msra.mxu0 %v399
      %401 = vmatprep.subr.mxu0 0.0
      %v402 = vand.u32 %v254, 4294901760
      %v403 = vsub.f32 %v254, %v402
      %v404 = vand.u32 %v403, 4294901760
      %v405 = vsub.f32 %v403, %v404
      %v406 = vand.u32 %v405, 4294901760
      %407 = vmatpush1.xpose.msra.mxu0 %v406
      %408 = vmatprep.subr.mxu0 0.0
      %409 = vmatpush2.xpose.msra.mxu0 0.0
      %410 = vmatprep.subr.mxu0 0.0
      %411 = vmatpush2.xpose.msra.mxu0 0.0
      %412 = vmatprep.subr.mxu0 0.0
      %413 = vmatpush2.xpose.msra.mxu0 0.0
      %414 = vmatprep.subr.mxu0 0.0
      %415 = vmatpush2.xpose.msra.mxu0 0.0
      %416 = vmatprep.subr.mxu0 0.0
      %417 = vmatpush2.xpose.msra.mxu0 0.0
      %418 = vmatprep.subr.mxu0 0.0
      %419 = vmatpush2.xpose.msra.mxu0 0.0
      %420 = vmatprep.subr.mxu0 0.0
      %421 = vmatpush2.xpose.msra.mxu0 0.0
      %422 = vmatprep.subr.mxu0 0.0
      %423 = vmatpush2.xpose.msra.mxu0 0.0
      %424 = vmatprep.subr.mxu0 0.0
      %425 = vmatpush2.xpose.msra.mxu0 0.0
      %426 = vmatprep.subr.mxu0 0.0
      %427 = vmatpush2.xpose.msra.mxu0 0.0
      %428 = vmatprep.subr.mxu0 0.0
      %429 = vmatpush2.xpose.msra.mxu0 0.0
      %430 = vmatprep.subr.mxu0 0.0
      %431 = vmatpush2.xpose.msra.mxu0 0.0
      %432 = vmatprep.subr.mxu0 0.0
      %433 = vmatpush2.xpose.msra.mxu0 0.0
      %434 = vmatprep.subr.mxu0 0.0
      %435 = vmatpush2.xpose.msra.mxu0 0.0
      %436 = vmatprep.subr.mxu0 0.0
      %437 = vmatpush2.xpose.msra.mxu0 0.0
      %438 = vmatprep.subr.mxu0 0.0
      %439 = vmatpush2.xpose.msra.mxu0 0.0
      %440 = vmatprep.mubr.f32.mxu0 0.0
      %v441 = vand.u32 %v242, 4294901760
      %442 = vmatmul.mubr.f32.gmra.mxu0 %v441
      %v443 = vpop.f32.mrf.mxu0
      %v444 = vadd.f32 %v333, %v443
      %v445 = vpop.f32.mrf.mxu0
      %446 = vmatprep.mubr.f32.mxu0 0.0
      %v447 = vand.u32 %v245, 4294901760
      %448 = vmatmul.mubr.f32.gmra.mxu0 %v447
      %v449 = vpop.f32.mrf.mxu0
      %v450 = vadd.f32 %v343, %v449
      %v451 = vpop.f32.mrf.mxu0
      %452 = vmatprep.mubr.f32.mxu0 0.0
      %v453 = vand.u32 %v248, 4294901760
      %454 = vmatmul.mubr.f32.gmra.mxu0 %v453
      %v455 = vpop.f32.mrf.mxu0
      %v456 = vadd.f32 %v353, %v455
      %v457 = vpop.f32.mrf.mxu0
      %458 = vmatprep.mubr.f32.mxu0 0.0
      %v459 = vand.u32 %v251, 4294901760
      %460 = vmatmul.mubr.f32.gmra.mxu0 %v459
      %v461 = vpop.f32.mrf.mxu0
      %v462 = vadd.f32 %v363, %v461
      %v463 = vpop.f32.mrf.mxu0
      %464 = vdwg.mxu0
      %465 = vmatprep.subr.mxu0 0.0
      %466 = vmatpush1.xpose.msra.mxu0 0.0
      %467 = vmatprep.subr.mxu0 0.0
      %468 = vmatpush1.xpose.msra.mxu0 0.0
      %469 = vmatprep.subr.mxu0 0.0
      %470 = vmatpush1.xpose.msra.mxu0 0.0
      %471 = vmatprep.subr.mxu0 0.0
      %472 = vmatpush1.xpose.msra.mxu0 0.0
      %473 = vmatprep.subr.mxu0 0.0
      %474 = vmatpush1.xpose.msra.mxu0 0.0
      %475 = vmatprep.subr.mxu0 0.0
      %476 = vmatpush1.xpose.msra.mxu0 0.0
      %477 = vmatprep.subr.mxu0 0.0
      %478 = vmatpush1.xpose.msra.mxu0 0.0
      %479 = vmatprep.subr.mxu0 0.0
      %480 = vmatpush1.xpose.msra.mxu0 0.0
      %481 = vmatprep.subr.mxu0 0.0
      %482 = vmatpush1.xpose.msra.mxu0 0.0
      %483 = vmatprep.subr.mxu0 0.0
      %484 = vmatpush1.xpose.msra.mxu0 0.0
      %485 = vmatprep.subr.mxu0 0.0
      %486 = vmatpush1.xpose.msra.mxu0 0.0
      %487 = vmatprep.subr.mxu0 0.0
      %488 = vmatpush1.xpose.msra.mxu0 0.0
      %489 = vmatprep.subr.mxu0 0.0
      %490 = vmatpush1.xpose.msra.mxu0 0.0
      %491 = vmatprep.subr.mxu0 0.0
      %492 = vmatpush1.xpose.msra.mxu0 0.0
      %493 = vmatprep.subr.mxu0 0.0
      %v494 = vand.u32 %v257, 4294901760
      %v495 = vsub.f32 %v257, %v494
      %496 = vmatpush1.xpose.msra.mxu0 %v495
      %497 = vmatprep.subr.mxu0 0.0
      %v498 = vand.u32 %v254, 4294901760
      %v499 = vsub.f32 %v254, %v498
      %500 = vmatpush1.xpose.msra.mxu0 %v499
      %501 = vmatprep.subr.mxu0 0.0
      %502 = vmatpush2.xpose.msra.mxu0 0.0
      %503 = vmatprep.subr.mxu0 0.0
      %504 = vmatpush2.xpose.msra.mxu0 0.0
      %505 = vmatprep.subr.mxu0 0.0
      %506 = vmatpush2.xpose.msra.mxu0 0.0
      %507 = vmatprep.subr.mxu0 0.0
      %508 = vmatpush2.xpose.msra.mxu0 0.0
      %509 = vmatprep.subr.mxu0 0.0
      %510 = vmatpush2.xpose.msra.mxu0 0.0
      %511 = vmatprep.subr.mxu0 0.0
      %512 = vmatpush2.xpose.msra.mxu0 0.0
      %513 = vmatprep.subr.mxu0 0.0
      %514 = vmatpush2.xpose.msra.mxu0 0.0
      %515 = vmatprep.subr.mxu0 0.0
      %516 = vmatpush2.xpose.msra.mxu0 0.0
      %517 = vmatprep.subr.mxu0 0.0
      %518 = vmatpush2.xpose.msra.mxu0 0.0
      %519 = vmatprep.subr.mxu0 0.0
      %520 = vmatpush2.xpose.msra.mxu0 0.0
      %521 = vmatprep.subr.mxu0 0.0
      %522 = vmatpush2.xpose.msra.mxu0 0.0
      %523 = vmatprep.subr.mxu0 0.0
      %524 = vmatpush2.xpose.msra.mxu0 0.0
      %525 = vmatprep.subr.mxu0 0.0
      %526 = vmatpush2.xpose.msra.mxu0 0.0
      %527 = vmatprep.subr.mxu0 0.0
      %528 = vmatpush2.xpose.msra.mxu0 0.0
      %529 = vmatprep.subr.mxu0 0.0
      %530 = vmatpush2.xpose.msra.mxu0 0.0
      %531 = vmatprep.subr.mxu0 0.0
      %532 = vmatpush2.xpose.msra.mxu0 0.0
      %533 = vmatprep.mubr.f32.mxu0 0.0
      %v534 = vand.u32 %v242, 4294901760
      %v535 = vsub.f32 %v242, %v534
      %536 = vmatmul.mubr.f32.gmra.mxu0 %v535
      %v537 = vpop.f32.mrf.mxu0
      %v538 = vadd.f32 %v444, %v537
      %v539 = vpop.f32.mrf.mxu0
      %540 = vmatprep.mubr.f32.mxu0 0.0
      %v541 = vand.u32 %v245, 4294901760
      %v542 = vsub.f32 %v245, %v541
      %543 = vmatmul.mubr.f32.gmra.mxu0 %v542
      %v544 = vpop.f32.mrf.mxu0
      %v545 = vadd.f32 %v450, %v544
      %v546 = vpop.f32.mrf.mxu0
      %547 = vmatprep.mubr.f32.mxu0 0.0
      %v548 = vand.u32 %v248, 4294901760
      %v549 = vsub.f32 %v248, %v548
      %550 = vmatmul.mubr.f32.gmra.mxu0 %v549
      %v551 = vpop.f32.mrf.mxu0
      %v552 = vadd.f32 %v456, %v551
      %v553 = vpop.f32.mrf.mxu0
      %554 = vmatprep.mubr.f32.mxu0 0.0
      %v555 = vand.u32 %v251, 4294901760
      %v556 = vsub.f32 %v251, %v555
      %557 = vmatmul.mubr.f32.gmra.mxu0 %v556
      %v558 = vpop.f32.mrf.mxu0
      %v559 = vadd.f32 %v462, %v558
      %v560 = vpop.f32.mrf.mxu0
      %561 = vdwg.mxu0
      %562 = vmatprep.subr.mxu0 0.0
      %563 = vmatpush1.xpose.msra.mxu0 0.0
      %564 = vmatprep.subr.mxu0 0.0
      %565 = vmatpush1.xpose.msra.mxu0 0.0
      %566 = vmatprep.subr.mxu0 0.0
      %567 = vmatpush1.xpose.msra.mxu0 0.0
      %568 = vmatprep.subr.mxu0 0.0
      %569 = vmatpush1.xpose.msra.mxu0 0.0
      %570 = vmatprep.subr.mxu0 0.0
      %571 = vmatpush1.xpose.msra.mxu0 0.0
      %572 = vmatprep.subr.mxu0 0.0
      %573 = vmatpush1.xpose.msra.mxu0 0.0
      %574 = vmatprep.subr.mxu0 0.0
      %575 = vmatpush1.xpose.msra.mxu0 0.0
      %576 = vmatprep.subr.mxu0 0.0
      %577 = vmatpush1.xpose.msra.mxu0 0.0
      %578 = vmatprep.subr.mxu0 0.0
      %579 = vmatpush1.xpose.msra.mxu0 0.0
      %580 = vmatprep.subr.mxu0 0.0
      %581 = vmatpush1.xpose.msra.mxu0 0.0
      %582 = vmatprep.subr.mxu0 0.0
      %583 = vmatpush1.xpose.msra.mxu0 0.0
      %584 = vmatprep.subr.mxu0 0.0
      %585 = vmatpush1.xpose.msra.mxu0 0.0
      %586 = vmatprep.subr.mxu0 0.0
      %587 = vmatpush1.xpose.msra.mxu0 0.0
      %588 = vmatprep.subr.mxu0 0.0
      %589 = vmatpush1.xpose.msra.mxu0 0.0
      %590 = vmatprep.subr.mxu0 0.0
      %v591 = vand.u32 %v257, 4294901760
      %592 = vmatpush1.xpose.msra.mxu0 %v591
      %593 = vmatprep.subr.mxu0 0.0
      %v594 = vand.u32 %v254, 4294901760
      %595 = vmatpush1.xpose.msra.mxu0 %v594
      %596 = vmatprep.subr.mxu0 0.0
      %597 = vmatpush2.xpose.msra.mxu0 0.0
      %598 = vmatprep.subr.mxu0 0.0
      %599 = vmatpush2.xpose.msra.mxu0 0.0
      %600 = vmatprep.subr.mxu0 0.0
      %601 = vmatpush2.xpose.msra.mxu0 0.0
      %602 = vmatprep.subr.mxu0 0.0
      %603 = vmatpush2.xpose.msra.mxu0 0.0
      %604 = vmatprep.subr.mxu0 0.0
      %605 = vmatpush2.xpose.msra.mxu0 0.0
      %606 = vmatprep.subr.mxu0 0.0
      %607 = vmatpush2.xpose.msra.mxu0 0.0
      %608 = vmatprep.subr.mxu0 0.0
      %609 = vmatpush2.xpose.msra.mxu0 0.0
      %610 = vmatprep.subr.mxu0 0.0
      %611 = vmatpush2.xpose.msra.mxu0 0.0
      %612 = vmatprep.subr.mxu0 0.0
      %613 = vmatpush2.xpose.msra.mxu0 0.0
      %614 = vmatprep.subr.mxu0 0.0
      %615 = vmatpush2.xpose.msra.mxu0 0.0
      %616 = vmatprep.subr.mxu0 0.0
      %617 = vmatpush2.xpose.msra.mxu0 0.0
      %618 = vmatprep.subr.mxu0 0.0
      %619 = vmatpush2.xpose.msra.mxu0 0.0
      %620 = vmatprep.subr.mxu0 0.0
      %621 = vmatpush2.xpose.msra.mxu0 0.0
      %622 = vmatprep.subr.mxu0 0.0
      %623 = vmatpush2.xpose.msra.mxu0 0.0
      %624 = vmatprep.subr.mxu0 0.0
      %625 = vmatpush2.xpose.msra.mxu0 0.0
      %626 = vmatprep.subr.mxu0 0.0
      %627 = vmatpush2.xpose.msra.mxu0 0.0
      %628 = vmatprep.mubr.f32.mxu0 0.0
      %v629 = vand.u32 %v242, 4294901760
      %v630 = vsub.f32 %v242, %v629
      %v631 = vand.u32 %v630, 4294901760
      %632 = vmatmul.mubr.f32.gmra.mxu0 %v631
      %v633 = vpop.f32.mrf.mxu0
      %v634 = vadd.f32 %v538, %v633
      %v635 = vpop.f32.mrf.mxu0
      %636 = vmatprep.mubr.f32.mxu0 0.0
      %v637 = vand.u32 %v245, 4294901760
      %v638 = vsub.f32 %v245, %v637
      %v639 = vand.u32 %v638, 4294901760
      %640 = vmatmul.mubr.f32.gmra.mxu0 %v639
      %v641 = vpop.f32.mrf.mxu0
      %v642 = vadd.f32 %v545, %v641
      %v643 = vpop.f32.mrf.mxu0
      %644 = vmatprep.mubr.f32.mxu0 0.0
      %v645 = vand.u32 %v248, 4294901760
      %v646 = vsub.f32 %v248, %v645
      %v647 = vand.u32 %v646, 4294901760
      %648 = vmatmul.mubr.f32.gmra.mxu0 %v647
      %v649 = vpop.f32.mrf.mxu0
      %v650 = vadd.f32 %v552, %v649
      %v651 = vpop.f32.mrf.mxu0
      %652 = vmatprep.mubr.f32.mxu0 0.0
      %v653 = vand.u32 %v251, 4294901760
      %v654 = vsub.f32 %v251, %v653
      %v655 = vand.u32 %v654, 4294901760
      %656 = vmatmul.mubr.f32.gmra.mxu0 %v655
      %v657 = vpop.f32.mrf.mxu0
      %v658 = vadd.f32 %v559, %v657
      %v659 = vpop.f32.mrf.mxu0
      %660 = vdwg.mxu0
      %661 = vmatprep.subr.mxu0 0.0
      %662 = vmatpush1.xpose.msra.mxu0 0.0
      %663 = vmatprep.subr.mxu0 0.0
      %664 = vmatpush1.xpose.msra.mxu0 0.0
      %665 = vmatprep.subr.mxu0 0.0
      %666 = vmatpush1.xpose.msra.mxu0 0.0
      %667 = vmatprep.subr.mxu0 0.0
      %668 = vmatpush1.xpose.msra.mxu0 0.0
      %669 = vmatprep.subr.mxu0 0.0
      %670 = vmatpush1.xpose.msra.mxu0 0.0
      %671 = vmatprep.subr.mxu0 0.0
      %672 = vmatpush1.xpose.msra.mxu0 0.0
      %673 = vmatprep.subr.mxu0 0.0
      %674 = vmatpush1.xpose.msra.mxu0 0.0
      %675 = vmatprep.subr.mxu0 0.0
      %676 = vmatpush1.xpose.msra.mxu0 0.0
      %677 = vmatprep.subr.mxu0 0.0
      %678 = vmatpush1.xpose.msra.mxu0 0.0
      %679 = vmatprep.subr.mxu0 0.0
      %680 = vmatpush1.xpose.msra.mxu0 0.0
      %681 = vmatprep.subr.mxu0 0.0
      %682 = vmatpush1.xpose.msra.mxu0 0.0
      %683 = vmatprep.subr.mxu0 0.0
      %684 = vmatpush1.xpose.msra.mxu0 0.0
      %685 = vmatprep.subr.mxu0 0.0
      %686 = vmatpush1.xpose.msra.mxu0 0.0
      %687 = vmatprep.subr.mxu0 0.0
      %688 = vmatpush1.xpose.msra.mxu0 0.0
      %689 = vmatprep.subr.mxu0 0.0
      %v690 = vand.u32 %v257, 4294901760
      %v691 = vsub.f32 %v257, %v690
      %v692 = vand.u32 %v691, 4294901760
      %693 = vmatpush1.xpose.msra.mxu0 %v692
      %694 = vmatprep.subr.mxu0 0.0
      %v695 = vand.u32 %v254, 4294901760
      %v696 = vsub.f32 %v254, %v695
      %v697 = vand.u32 %v696, 4294901760
      %698 = vmatpush1.xpose.msra.mxu0 %v697
      %699 = vmatprep.subr.mxu0 0.0
      %700 = vmatpush2.xpose.msra.mxu0 0.0
      %701 = vmatprep.subr.mxu0 0.0
      %702 = vmatpush2.xpose.msra.mxu0 0.0
      %703 = vmatprep.subr.mxu0 0.0
      %704 = vmatpush2.xpose.msra.mxu0 0.0
      %705 = vmatprep.subr.mxu0 0.0
      %706 = vmatpush2.xpose.msra.mxu0 0.0
      %707 = vmatprep.subr.mxu0 0.0
      %708 = vmatpush2.xpose.msra.mxu0 0.0
      %709 = vmatprep.subr.mxu0 0.0
      %710 = vmatpush2.xpose.msra.mxu0 0.0
      %711 = vmatprep.subr.mxu0 0.0
      %712 = vmatpush2.xpose.msra.mxu0 0.0
      %713 = vmatprep.subr.mxu0 0.0
      %714 = vmatpush2.xpose.msra.mxu0 0.0
      %715 = vmatprep.subr.mxu0 0.0
      %716 = vmatpush2.xpose.msra.mxu0 0.0
      %717 = vmatprep.subr.mxu0 0.0
      %718 = vmatpush2.xpose.msra.mxu0 0.0
      %719 = vmatprep.subr.mxu0 0.0
      %720 = vmatpush2.xpose.msra.mxu0 0.0
      %721 = vmatprep.subr.mxu0 0.0
      %722 = vmatpush2.xpose.msra.mxu0 0.0
      %723 = vmatprep.subr.mxu0 0.0
      %724 = vmatpush2.xpose.msra.mxu0 0.0
      %725 = vmatprep.subr.mxu0 0.0
      %726 = vmatpush2.xpose.msra.mxu0 0.0
      %727 = vmatprep.subr.mxu0 0.0
      %728 = vmatpush2.xpose.msra.mxu0 0.0
      %729 = vmatprep.subr.mxu0 0.0
      %730 = vmatpush2.xpose.msra.mxu0 0.0
      %731 = vmatprep.mubr.f32.mxu0 0.0
      %v732 = vand.u32 %v242, 4294901760
      %733 = vmatmul.mubr.f32.gmra.mxu0 %v732
      %v734 = vpop.f32.mrf.mxu0
      %v735 = vadd.f32 %v634, %v734
      %v736 = vpop.f32.mrf.mxu0
      %737 = vmatprep.mubr.f32.mxu0 0.0
      %v738 = vand.u32 %v245, 4294901760
      %739 = vmatmul.mubr.f32.gmra.mxu0 %v738
      %v740 = vpop.f32.mrf.mxu0
      %v741 = vadd.f32 %v642, %v740
      %v742 = vpop.f32.mrf.mxu0
      %743 = vmatprep.mubr.f32.mxu0 0.0
      %v744 = vand.u32 %v248, 4294901760
      %745 = vmatmul.mubr.f32.gmra.mxu0 %v744
      %v746 = vpop.f32.mrf.mxu0
      %v747 = vadd.f32 %v650, %v746
      %v748 = vpop.f32.mrf.mxu0
      %749 = vmatprep.mubr.f32.mxu0 0.0
      %v750 = vand.u32 %v251, 4294901760
      %751 = vmatmul.mubr.f32.gmra.mxu0 %v750
      %v752 = vpop.f32.mrf.mxu0
      %v753 = vadd.f32 %v658, %v752
      %v754 = vpop.f32.mrf.mxu0
      %755 = vdwg.mxu0
      %756 = vmatprep.subr.mxu0 0.0
      %757 = vmatpush1.xpose.msra.mxu0 0.0
      %758 = vmatprep.subr.mxu0 0.0
      %759 = vmatpush1.xpose.msra.mxu0 0.0
      %760 = vmatprep.subr.mxu0 0.0
      %761 = vmatpush1.xpose.msra.mxu0 0.0
      %762 = vmatprep.subr.mxu0 0.0
      %763 = vmatpush1.xpose.msra.mxu0 0.0
      %764 = vmatprep.subr.mxu0 0.0
      %765 = vmatpush1.xpose.msra.mxu0 0.0
      %766 = vmatprep.subr.mxu0 0.0
      %767 = vmatpush1.xpose.msra.mxu0 0.0
      %768 = vmatprep.subr.mxu0 0.0
      %769 = vmatpush1.xpose.msra.mxu0 0.0
      %770 = vmatprep.subr.mxu0 0.0
      %771 = vmatpush1.xpose.msra.mxu0 0.0
      %772 = vmatprep.subr.mxu0 0.0
      %773 = vmatpush1.xpose.msra.mxu0 0.0
      %774 = vmatprep.subr.mxu0 0.0
      %775 = vmatpush1.xpose.msra.mxu0 0.0
      %776 = vmatprep.subr.mxu0 0.0
      %777 = vmatpush1.xpose.msra.mxu0 0.0
      %778 = vmatprep.subr.mxu0 0.0
      %779 = vmatpush1.xpose.msra.mxu0 0.0
      %780 = vmatprep.subr.mxu0 0.0
      %781 = vmatpush1.xpose.msra.mxu0 0.0
      %782 = vmatprep.subr.mxu0 0.0
      %783 = vmatpush1.xpose.msra.mxu0 0.0
      %784 = vmatprep.subr.mxu0 0.0
      %v785 = vand.u32 %v257, 4294901760
      %786 = vmatpush1.xpose.msra.mxu0 %v785
      %787 = vmatprep.subr.mxu0 0.0
      %v788 = vand.u32 %v254, 4294901760
      %789 = vmatpush1.xpose.msra.mxu0 %v788
      %790 = vmatprep.subr.mxu0 0.0
      %791 = vmatpush2.xpose.msra.mxu0 0.0
      %792 = vmatprep.subr.mxu0 0.0
      %793 = vmatpush2.xpose.msra.mxu0 0.0
      %794 = vmatprep.subr.mxu0 0.0
      %795 = vmatpush2.xpose.msra.mxu0 0.0
      %796 = vmatprep.subr.mxu0 0.0
      %797 = vmatpush2.xpose.msra.mxu0 0.0
      %798 = vmatprep.subr.mxu0 0.0
      %799 = vmatpush2.xpose.msra.mxu0 0.0
      %800 = vmatprep.subr.mxu0 0.0
      %801 = vmatpush2.xpose.msra.mxu0 0.0
      %802 = vmatprep.subr.mxu0 0.0
      %803 = vmatpush2.xpose.msra.mxu0 0.0
      %804 = vmatprep.subr.mxu0 0.0
      %805 = vmatpush2.xpose.msra.mxu0 0.0
      %806 = vmatprep.subr.mxu0 0.0
      %807 = vmatpush2.xpose.msra.mxu0 0.0
      %808 = vmatprep.subr.mxu0 0.0
      %809 = vmatpush2.xpose.msra.mxu0 0.0
      %810 = vmatprep.subr.mxu0 0.0
      %811 = vmatpush2.xpose.msra.mxu0 0.0
      %812 = vmatprep.subr.mxu0 0.0
      %813 = vmatpush2.xpose.msra.mxu0 0.0
      %814 = vmatprep.subr.mxu0 0.0
      %815 = vmatpush2.xpose.msra.mxu0 0.0
      %816 = vmatprep.subr.mxu0 0.0
      %817 = vmatpush2.xpose.msra.mxu0 0.0
      %818 = vmatprep.subr.mxu0 0.0
      %819 = vmatpush2.xpose.msra.mxu0 0.0
      %820 = vmatprep.subr.mxu0 0.0
      %821 = vmatpush2.xpose.msra.mxu0 0.0
      %822 = vmatprep.mubr.f32.mxu0 0.0
      %v823 = vand.u32 %v242, 4294901760
      %824 = vmatmul.mubr.f32.gmra.mxu0 %v823
      %v825 = vpop.f32.mrf.mxu0
      %v826 = vadd.f32 %v735, %v825
      %v827 = vpop.f32.mrf.mxu0
      %828 = vmatprep.mubr.f32.mxu0 0.0
      %v829 = vand.u32 %v245, 4294901760
      %830 = vmatmul.mubr.f32.gmra.mxu0 %v829
      %v831 = vpop.f32.mrf.mxu0
      %v832 = vadd.f32 %v741, %v831
      %v833 = vpop.f32.mrf.mxu0
      %834 = vmatprep.mubr.f32.mxu0 0.0
      %v835 = vand.u32 %v248, 4294901760
      %836 = vmatmul.mubr.f32.gmra.mxu0 %v835
      %v837 = vpop.f32.mrf.mxu0
      %v838 = vadd.f32 %v747, %v837
      %v839 = vpop.f32.mrf.mxu0
      %840 = vmatprep.mubr.f32.mxu0 0.0
      %v841 = vand.u32 %v251, 4294901760
      %842 = vmatmul.mubr.f32.gmra.mxu0 %v841
      %v843 = vpop.f32.mrf.mxu0
      %v844 = vadd.f32 %v753, %v843
      %v845 = vpop.f32.mrf.mxu0
      %846 = vdwg.mxu0
      %v847 = vld [vmem:[%s224] sm:$0xff]
      %v848 = vlaneseq
      %v849 = vshrl.u32 %v848, 7
      %v850 = vsub.s32 0, %v849
      %v851 = vrot.slane %v847, %v850
      %v852 = vmul.f32 %v236, %v851
      %v853 = vmul.f32 %v237, %v851
      %v854 = vmul.f32 %v238, %v851
      %v855 = vmul.f32 %v239, %v851
      %v856 = vsel %vm240, %v852, 0.0
      %857 = vadd.xlane.f32.xlu0 %v856
      %v858 = vpop.xlane.xlu0 %857
      %v859 = vsel %vm240, %v853, 0.0
      %860 = vadd.xlane.f32.xlu0 %v859
      %v861 = vpop.xlane.xlu0 %860
      %v862 = vsel %vm240, %v854, 0.0
      %863 = vadd.xlane.f32.xlu0 %v862
      %v864 = vpop.xlane.xlu0 %863
      %v865 = vsel %vm240, %v855, 0.0
      %866 = vadd.xlane.f32.xlu0 %v865
      %v867 = vpop.xlane.xlu0 %866
      %872 = vrot.lane.b32.xlu0 %v826, 127
      %v873 = vpop.permute.xlu0 %872
      %874 = vrot.lane.b32.xlu0 %v832, 127
      %v875 = vpop.permute.xlu0 %874
      %876 = vrot.lane.b32.xlu0 %v838, 127
      %v877 = vpop.permute.xlu0 %876
      %878 = vrot.lane.b32.xlu0 %v844, 127
      %v879 = vpop.permute.xlu0 %878
      %vm884 = vcmask 121856
      %v885 = vsel %vm884, %v873, %v858
      %v886 = vsel %vm884, %v875, %v861
      %v887 = vsel %vm884, %v877, %v864
      %v888 = vsel %vm884, %v879, %v867
      %v890 = vsel %vm240, %v232, 0
      %v893 = vsel %vm240, %v233, 0
      %v896 = vsel %vm240, %v234, 0
      %v899 = vsel %vm240, %v235, 0
      %901 = vmatprep.subr.mxu0 0.0
      %902 = vmatpush1.xpose.msra.mxu0 0.0
      %903 = vmatprep.subr.mxu0 0.0
      %904 = vmatpush1.xpose.msra.mxu0 0.0
      %905 = vmatprep.subr.mxu0 0.0
      %906 = vmatpush1.xpose.msra.mxu0 0.0
      %907 = vmatprep.subr.mxu0 0.0
      %908 = vmatpush1.xpose.msra.mxu0 0.0
      %909 = vmatprep.subr.mxu0 0.0
      %910 = vmatpush1.xpose.msra.mxu0 0.0
      %911 = vmatprep.subr.mxu0 0.0
      %912 = vmatpush1.xpose.msra.mxu0 0.0
      %913 = vmatprep.subr.mxu0 0.0
      %914 = vmatpush1.xpose.msra.mxu0 0.0
      %915 = vmatprep.subr.mxu0 0.0
      %916 = vmatpush1.xpose.msra.mxu0 0.0
      %917 = vmatprep.subr.mxu0 0.0
      %918 = vmatpush1.xpose.msra.mxu0 0.0
      %919 = vmatprep.subr.mxu0 0.0
      %920 = vmatpush1.xpose.msra.mxu0 0.0
      %921 = vmatprep.subr.mxu0 0.0
      %922 = vmatpush1.xpose.msra.mxu0 0.0
      %923 = vmatprep.subr.mxu0 0.0
      %924 = vmatpush1.xpose.msra.mxu0 0.0
      %925 = vmatprep.subr.mxu0 0.0
      %926 = vmatpush1.xpose.msra.mxu0 0.0
      %927 = vmatprep.subr.mxu0 0.0
      %928 = vmatpush1.xpose.msra.mxu0 0.0
      %929 = vmatprep.subr.mxu0 0.0
      %v930 = vand.u32 %v257, 4294901760
      %931 = vmatpush1.xpose.msra.mxu0 %v930
      %932 = vmatprep.subr.mxu0 0.0
      %v933 = vand.u32 %v254, 4294901760
      %934 = vmatpush1.xpose.msra.mxu0 %v933
      %935 = vmatprep.subr.mxu0 0.0
      %936 = vmatpush2.xpose.msra.mxu0 0.0
      %937 = vmatprep.subr.mxu0 0.0
      %938 = vmatpush2.xpose.msra.mxu0 0.0
      %939 = vmatprep.subr.mxu0 0.0
      %940 = vmatpush2.xpose.msra.mxu0 0.0
      %941 = vmatprep.subr.mxu0 0.0
      %942 = vmatpush2.xpose.msra.mxu0 0.0
      %943 = vmatprep.subr.mxu0 0.0
      %944 = vmatpush2.xpose.msra.mxu0 0.0
      %945 = vmatprep.subr.mxu0 0.0
      %946 = vmatpush2.xpose.msra.mxu0 0.0
      %947 = vmatprep.subr.mxu0 0.0
      %948 = vmatpush2.xpose.msra.mxu0 0.0
      %949 = vmatprep.subr.mxu0 0.0
      %950 = vmatpush2.xpose.msra.mxu0 0.0
      %951 = vmatprep.subr.mxu0 0.0
      %952 = vmatpush2.xpose.msra.mxu0 0.0
      %953 = vmatprep.subr.mxu0 0.0
      %954 = vmatpush2.xpose.msra.mxu0 0.0
      %955 = vmatprep.subr.mxu0 0.0
      %956 = vmatpush2.xpose.msra.mxu0 0.0
      %957 = vmatprep.subr.mxu0 0.0
      %958 = vmatpush2.xpose.msra.mxu0 0.0
      %959 = vmatprep.subr.mxu0 0.0
      %960 = vmatpush2.xpose.msra.mxu0 0.0
      %961 = vmatprep.subr.mxu0 0.0
      %962 = vmatpush2.xpose.msra.mxu0 0.0
      %963 = vmatprep.subr.mxu0 0.0
      %964 = vmatpush2.xpose.msra.mxu0 0.0
      %965 = vmatprep.subr.mxu0 0.0
      %966 = vmatpush2.xpose.msra.mxu0 0.0
      %967 = vmatprep.mubr.f32.mxu0 0.0
      %v968 = vand.u32 %v890, 4294901760
      %v969 = vsub.f32 %v890, %v968
      %v970 = vand.u32 %v969, 4294901760
      %v971 = vsub.f32 %v969, %v970
      %v972 = vand.u32 %v971, 4294901760
      %973 = vmatmul.mubr.f32.gmra.mxu0 %v972
      %v974 = vpop.f32.mrf.mxu0
      %v975 = vadd.f32 %v885, %v974
      %v976 = vpop.f32.mrf.mxu0
      %977 = vmatprep.mubr.f32.mxu0 0.0
      %v978 = vand.u32 %v893, 4294901760
      %v979 = vsub.f32 %v893, %v978
      %v980 = vand.u32 %v979, 4294901760
      %v981 = vsub.f32 %v979, %v980
      %v982 = vand.u32 %v981, 4294901760
      %983 = vmatmul.mubr.f32.gmra.mxu0 %v982
      %v984 = vpop.f32.mrf.mxu0
      %v985 = vadd.f32 %v886, %v984
      %v986 = vpop.f32.mrf.mxu0
      %987 = vmatprep.mubr.f32.mxu0 0.0
      %v988 = vand.u32 %v896, 4294901760
      %v989 = vsub.f32 %v896, %v988
      %v990 = vand.u32 %v989, 4294901760
      %v991 = vsub.f32 %v989, %v990
      %v992 = vand.u32 %v991, 4294901760
      %993 = vmatmul.mubr.f32.gmra.mxu0 %v992
      %v994 = vpop.f32.mrf.mxu0
      %v995 = vadd.f32 %v887, %v994
      %v996 = vpop.f32.mrf.mxu0
      %997 = vmatprep.mubr.f32.mxu0 0.0
      %v998 = vand.u32 %v899, 4294901760
      %v999 = vsub.f32 %v899, %v998
      %v1000 = vand.u32 %v999, 4294901760
      %v1001 = vsub.f32 %v999, %v1000
      %v1002 = vand.u32 %v1001, 4294901760
      %1003 = vmatmul.mubr.f32.gmra.mxu0 %v1002
      %v1004 = vpop.f32.mrf.mxu0
      %v1005 = vadd.f32 %v888, %v1004
      %v1006 = vpop.f32.mrf.mxu0
      %1007 = vdwg.mxu0
      %1008 = vmatprep.subr.mxu0 0.0
      %1009 = vmatpush1.xpose.msra.mxu0 0.0
      %1010 = vmatprep.subr.mxu0 0.0
      %1011 = vmatpush1.xpose.msra.mxu0 0.0
      %1012 = vmatprep.subr.mxu0 0.0
      %1013 = vmatpush1.xpose.msra.mxu0 0.0
      %1014 = vmatprep.subr.mxu0 0.0
      %1015 = vmatpush1.xpose.msra.mxu0 0.0
      %1016 = vmatprep.subr.mxu0 0.0
      %1017 = vmatpush1.xpose.msra.mxu0 0.0
      %1018 = vmatprep.subr.mxu0 0.0
      %1019 = vmatpush1.xpose.msra.mxu0 0.0
      %1020 = vmatprep.subr.mxu0 0.0
      %1021 = vmatpush1.xpose.msra.mxu0 0.0
      %1022 = vmatprep.subr.mxu0 0.0
      %1023 = vmatpush1.xpose.msra.mxu0 0.0
      %1024 = vmatprep.subr.mxu0 0.0
      %1025 = vmatpush1.xpose.msra.mxu0 0.0
      %1026 = vmatprep.subr.mxu0 0.0
      %1027 = vmatpush1.xpose.msra.mxu0 0.0
      %1028 = vmatprep.subr.mxu0 0.0
      %1029 = vmatpush1.xpose.msra.mxu0 0.0
      %1030 = vmatprep.subr.mxu0 0.0
      %1031 = vmatpush1.xpose.msra.mxu0 0.0
      %1032 = vmatprep.subr.mxu0 0.0
      %1033 = vmatpush1.xpose.msra.mxu0 0.0
      %1034 = vmatprep.subr.mxu0 0.0
      %1035 = vmatpush1.xpose.msra.mxu0 0.0
      %1036 = vmatprep.subr.mxu0 0.0
      %v1037 = vand.u32 %v257, 4294901760
      %v1038 = vsub.f32 %v257, %v1037
      %v1039 = vand.u32 %v1038, 4294901760
      %v1040 = vsub.f32 %v1038, %v1039
      %v1041 = vand.u32 %v1040, 4294901760
      %1042 = vmatpush1.xpose.msra.mxu0 %v1041
      %1043 = vmatprep.subr.mxu0 0.0
      %v1044 = vand.u32 %v254, 4294901760
      %v1045 = vsub.f32 %v254, %v1044
      %v1046 = vand.u32 %v1045, 4294901760
      %v1047 = vsub.f32 %v1045, %v1046
      %v1048 = vand.u32 %v1047, 4294901760
      %1049 = vmatpush1.xpose.msra.mxu0 %v1048
      %1050 = vmatprep.subr.mxu0 0.0
      %1051 = vmatpush2.xpose.msra.mxu0 0.0
      %1052 = vmatprep.subr.mxu0 0.0
      %1053 = vmatpush2.xpose.msra.mxu0 0.0
      %1054 = vmatprep.subr.mxu0 0.0
      %1055 = vmatpush2.xpose.msra.mxu0 0.0
      %1056 = vmatprep.subr.mxu0 0.0
      %1057 = vmatpush2.xpose.msra.mxu0 0.0
      %1058 = vmatprep.subr.mxu0 0.0
      %1059 = vmatpush2.xpose.msra.mxu0 0.0
      %1060 = vmatprep.subr.mxu0 0.0
      %1061 = vmatpush2.xpose.msra.mxu0 0.0
      %1062 = vmatprep.subr.mxu0 0.0
      %1063 = vmatpush2.xpose.msra.mxu0 0.0
      %1064 = vmatprep.subr.mxu0 0.0
      %1065 = vmatpush2.xpose.msra.mxu0 0.0
      %1066 = vmatprep.subr.mxu0 0.0
      %1067 = vmatpush2.xpose.msra.mxu0 0.0
      %1068 = vmatprep.subr.mxu0 0.0
      %1069 = vmatpush2.xpose.msra.mxu0 0.0
      %1070 = vmatprep.subr.mxu0 0.0
      %1071 = vmatpush2.xpose.msra.mxu0 0.0
      %1072 = vmatprep.subr.mxu0 0.0
      %1073 = vmatpush2.xpose.msra.mxu0 0.0
      %1074 = vmatprep.subr.mxu0 0.0
      %1075 = vmatpush2.xpose.msra.mxu0 0.0
      %1076 = vmatprep.subr.mxu0 0.0
      %1077 = vmatpush2.xpose.msra.mxu0 0.0
      %1078 = vmatprep.subr.mxu0 0.0
      %1079 = vmatpush2.xpose.msra.mxu0 0.0
      %1080 = vmatprep.subr.mxu0 0.0
      %1081 = vmatpush2.xpose.msra.mxu0 0.0
      %1082 = vmatprep.mubr.f32.mxu0 0.0
      %v1083 = vand.u32 %v890, 4294901760
      %1084 = vmatmul.mubr.f32.gmra.mxu0 %v1083
      %v1085 = vpop.f32.mrf.mxu0
      %v1086 = vadd.f32 %v975, %v1085
      %v1087 = vpop.f32.mrf.mxu0
      %1088 = vmatprep.mubr.f32.mxu0 0.0
      %v1089 = vand.u32 %v893, 4294901760
      %1090 = vmatmul.mubr.f32.gmra.mxu0 %v1089
      %v1091 = vpop.f32.mrf.mxu0
      %v1092 = vadd.f32 %v985, %v1091
      %v1093 = vpop.f32.mrf.mxu0
      %1094 = vmatprep.mubr.f32.mxu0 0.0
      %v1095 = vand.u32 %v896, 4294901760
      %1096 = vmatmul.mubr.f32.gmra.mxu0 %v1095
      %v1097 = vpop.f32.mrf.mxu0
      %v1098 = vadd.f32 %v995, %v1097
      %v1099 = vpop.f32.mrf.mxu0
      %1100 = vmatprep.mubr.f32.mxu0 0.0
      %v1101 = vand.u32 %v899, 4294901760
      %1102 = vmatmul.mubr.f32.gmra.mxu0 %v1101
      %v1103 = vpop.f32.mrf.mxu0
      %v1104 = vadd.f32 %v1005, %v1103
      %v1105 = vpop.f32.mrf.mxu0
      %1106 = vdwg.mxu0
      %1107 = vmatprep.subr.mxu0 0.0
      %1108 = vmatpush1.xpose.msra.mxu0 0.0
      %1109 = vmatprep.subr.mxu0 0.0
      %1110 = vmatpush1.xpose.msra.mxu0 0.0
      %1111 = vmatprep.subr.mxu0 0.0
      %1112 = vmatpush1.xpose.msra.mxu0 0.0
      %1113 = vmatprep.subr.mxu0 0.0
      %1114 = vmatpush1.xpose.msra.mxu0 0.0
      %1115 = vmatprep.subr.mxu0 0.0
      %1116 = vmatpush1.xpose.msra.mxu0 0.0
      %1117 = vmatprep.subr.mxu0 0.0
      %1118 = vmatpush1.xpose.msra.mxu0 0.0
      %1119 = vmatprep.subr.mxu0 0.0
      %1120 = vmatpush1.xpose.msra.mxu0 0.0
      %1121 = vmatprep.subr.mxu0 0.0
      %1122 = vmatpush1.xpose.msra.mxu0 0.0
      %1123 = vmatprep.subr.mxu0 0.0
      %1124 = vmatpush1.xpose.msra.mxu0 0.0
      %1125 = vmatprep.subr.mxu0 0.0
      %1126 = vmatpush1.xpose.msra.mxu0 0.0
      %1127 = vmatprep.subr.mxu0 0.0
      %1128 = vmatpush1.xpose.msra.mxu0 0.0
      %1129 = vmatprep.subr.mxu0 0.0
      %1130 = vmatpush1.xpose.msra.mxu0 0.0
      %1131 = vmatprep.subr.mxu0 0.0
      %1132 = vmatpush1.xpose.msra.mxu0 0.0
      %1133 = vmatprep.subr.mxu0 0.0
      %1134 = vmatpush1.xpose.msra.mxu0 0.0
      %1135 = vmatprep.subr.mxu0 0.0
      %v1136 = vand.u32 %v257, 4294901760
      %v1137 = vsub.f32 %v257, %v1136
      %1138 = vmatpush1.xpose.msra.mxu0 %v1137
      %1139 = vmatprep.subr.mxu0 0.0
      %v1140 = vand.u32 %v254, 4294901760
      %v1141 = vsub.f32 %v254, %v1140
      %1142 = vmatpush1.xpose.msra.mxu0 %v1141
      %1143 = vmatprep.subr.mxu0 0.0
      %1144 = vmatpush2.xpose.msra.mxu0 0.0
      %1145 = vmatprep.subr.mxu0 0.0
      %1146 = vmatpush2.xpose.msra.mxu0 0.0
      %1147 = vmatprep.subr.mxu0 0.0
      %1148 = vmatpush2.xpose.msra.mxu0 0.0
      %1149 = vmatprep.subr.mxu0 0.0
      %1150 = vmatpush2.xpose.msra.mxu0 0.0
      %1151 = vmatprep.subr.mxu0 0.0
      %1152 = vmatpush2.xpose.msra.mxu0 0.0
      %1153 = vmatprep.subr.mxu0 0.0
      %1154 = vmatpush2.xpose.msra.mxu0 0.0
      %1155 = vmatprep.subr.mxu0 0.0
      %1156 = vmatpush2.xpose.msra.mxu0 0.0
      %1157 = vmatprep.subr.mxu0 0.0
      %1158 = vmatpush2.xpose.msra.mxu0 0.0
      %1159 = vmatprep.subr.mxu0 0.0
      %1160 = vmatpush2.xpose.msra.mxu0 0.0
      %1161 = vmatprep.subr.mxu0 0.0
      %1162 = vmatpush2.xpose.msra.mxu0 0.0
      %1163 = vmatprep.subr.mxu0 0.0
      %1164 = vmatpush2.xpose.msra.mxu0 0.0
      %1165 = vmatprep.subr.mxu0 0.0
      %1166 = vmatpush2.xpose.msra.mxu0 0.0
      %1167 = vmatprep.subr.mxu0 0.0
      %1168 = vmatpush2.xpose.msra.mxu0 0.0
      %1169 = vmatprep.subr.mxu0 0.0
      %1170 = vmatpush2.xpose.msra.mxu0 0.0
      %1171 = vmatprep.subr.mxu0 0.0
      %1172 = vmatpush2.xpose.msra.mxu0 0.0
      %1173 = vmatprep.subr.mxu0 0.0
      %1174 = vmatpush2.xpose.msra.mxu0 0.0
      %1175 = vmatprep.mubr.f32.mxu0 0.0
      %v1176 = vand.u32 %v890, 4294901760
      %v1177 = vsub.f32 %v890, %v1176
      %1178 = vmatmul.mubr.f32.gmra.mxu0 %v1177
      %v1179 = vpop.f32.mrf.mxu0
      %v1180 = vadd.f32 %v1086, %v1179
      %v1181 = vpop.f32.mrf.mxu0
      %1182 = vmatprep.mubr.f32.mxu0 0.0
      %v1183 = vand.u32 %v893, 4294901760
      %v1184 = vsub.f32 %v893, %v1183
      %1185 = vmatmul.mubr.f32.gmra.mxu0 %v1184
      %v1186 = vpop.f32.mrf.mxu0
      %v1187 = vadd.f32 %v1092, %v1186
      %v1188 = vpop.f32.mrf.mxu0
      %1189 = vmatprep.mubr.f32.mxu0 0.0
      %v1190 = vand.u32 %v896, 4294901760
      %v1191 = vsub.f32 %v896, %v1190
      %1192 = vmatmul.mubr.f32.gmra.mxu0 %v1191
      %v1193 = vpop.f32.mrf.mxu0
      %v1194 = vadd.f32 %v1098, %v1193
      %v1195 = vpop.f32.mrf.mxu0
      %1196 = vmatprep.mubr.f32.mxu0 0.0
      %v1197 = vand.u32 %v899, 4294901760
      %v1198 = vsub.f32 %v899, %v1197
      %1199 = vmatmul.mubr.f32.gmra.mxu0 %v1198
      %v1200 = vpop.f32.mrf.mxu0
      %v1201 = vadd.f32 %v1104, %v1200
      %v1202 = vpop.f32.mrf.mxu0
      %1203 = vdwg.mxu0
      %1204 = vmatprep.subr.mxu0 0.0
      %1205 = vmatpush1.xpose.msra.mxu0 0.0
      %1206 = vmatprep.subr.mxu0 0.0
      %1207 = vmatpush1.xpose.msra.mxu0 0.0
      %1208 = vmatprep.subr.mxu0 0.0
      %1209 = vmatpush1.xpose.msra.mxu0 0.0
      %1210 = vmatprep.subr.mxu0 0.0
      %1211 = vmatpush1.xpose.msra.mxu0 0.0
      %1212 = vmatprep.subr.mxu0 0.0
      %1213 = vmatpush1.xpose.msra.mxu0 0.0
      %1214 = vmatprep.subr.mxu0 0.0
      %1215 = vmatpush1.xpose.msra.mxu0 0.0
      %1216 = vmatprep.subr.mxu0 0.0
      %1217 = vmatpush1.xpose.msra.mxu0 0.0
      %1218 = vmatprep.subr.mxu0 0.0
      %1219 = vmatpush1.xpose.msra.mxu0 0.0
      %1220 = vmatprep.subr.mxu0 0.0
      %1221 = vmatpush1.xpose.msra.mxu0 0.0
      %1222 = vmatprep.subr.mxu0 0.0
      %1223 = vmatpush1.xpose.msra.mxu0 0.0
      %1224 = vmatprep.subr.mxu0 0.0
      %1225 = vmatpush1.xpose.msra.mxu0 0.0
      %1226 = vmatprep.subr.mxu0 0.0
      %1227 = vmatpush1.xpose.msra.mxu0 0.0
      %1228 = vmatprep.subr.mxu0 0.0
      %1229 = vmatpush1.xpose.msra.mxu0 0.0
      %1230 = vmatprep.subr.mxu0 0.0
      %1231 = vmatpush1.xpose.msra.mxu0 0.0
      %1232 = vmatprep.subr.mxu0 0.0
      %v1233 = vand.u32 %v257, 4294901760
      %1234 = vmatpush1.xpose.msra.mxu0 %v1233
      %1235 = vmatprep.subr.mxu0 0.0
      %v1236 = vand.u32 %v254, 4294901760
      %1237 = vmatpush1.xpose.msra.mxu0 %v1236
      %1238 = vmatprep.subr.mxu0 0.0
      %1239 = vmatpush2.xpose.msra.mxu0 0.0
      %1240 = vmatprep.subr.mxu0 0.0
      %1241 = vmatpush2.xpose.msra.mxu0 0.0
      %1242 = vmatprep.subr.mxu0 0.0
      %1243 = vmatpush2.xpose.msra.mxu0 0.0
      %1244 = vmatprep.subr.mxu0 0.0
      %1245 = vmatpush2.xpose.msra.mxu0 0.0
      %1246 = vmatprep.subr.mxu0 0.0
      %1247 = vmatpush2.xpose.msra.mxu0 0.0
      %1248 = vmatprep.subr.mxu0 0.0
      %1249 = vmatpush2.xpose.msra.mxu0 0.0
      %1250 = vmatprep.subr.mxu0 0.0
      %1251 = vmatpush2.xpose.msra.mxu0 0.0
      %1252 = vmatprep.subr.mxu0 0.0
      %1253 = vmatpush2.xpose.msra.mxu0 0.0
      %1254 = vmatprep.subr.mxu0 0.0
      %1255 = vmatpush2.xpose.msra.mxu0 0.0
      %1256 = vmatprep.subr.mxu0 0.0
      %1257 = vmatpush2.xpose.msra.mxu0 0.0
      %1258 = vmatprep.subr.mxu0 0.0
      %1259 = vmatpush2.xpose.msra.mxu0 0.0
      %1260 = vmatprep.subr.mxu0 0.0
      %1261 = vmatpush2.xpose.msra.mxu0 0.0
      %1262 = vmatprep.subr.mxu0 0.0
      %1263 = vmatpush2.xpose.msra.mxu0 0.0
      %1264 = vmatprep.subr.mxu0 0.0
      %1265 = vmatpush2.xpose.msra.mxu0 0.0
      %1266 = vmatprep.subr.mxu0 0.0
      %1267 = vmatpush2.xpose.msra.mxu0 0.0
      %1268 = vmatprep.subr.mxu0 0.0
      %1269 = vmatpush2.xpose.msra.mxu0 0.0
      %1270 = vmatprep.mubr.f32.mxu0 0.0
      %v1271 = vand.u32 %v890, 4294901760
      %v1272 = vsub.f32 %v890, %v1271
      %v1273 = vand.u32 %v1272, 4294901760
      %1274 = vmatmul.mubr.f32.gmra.mxu0 %v1273
      %v1275 = vpop.f32.mrf.mxu0
      %v1276 = vadd.f32 %v1180, %v1275
      %v1277 = vpop.f32.mrf.mxu0
      %1278 = vmatprep.mubr.f32.mxu0 0.0
      %v1279 = vand.u32 %v893, 4294901760
      %v1280 = vsub.f32 %v893, %v1279
      %v1281 = vand.u32 %v1280, 4294901760
      %1282 = vmatmul.mubr.f32.gmra.mxu0 %v1281
      %v1283 = vpop.f32.mrf.mxu0
      %v1284 = vadd.f32 %v1187, %v1283
      %v1285 = vpop.f32.mrf.mxu0
      %1286 = vmatprep.mubr.f32.mxu0 0.0
      %v1287 = vand.u32 %v896, 4294901760
      %v1288 = vsub.f32 %v896, %v1287
      %v1289 = vand.u32 %v1288, 4294901760
      %1290 = vmatmul.mubr.f32.gmra.mxu0 %v1289
      %v1291 = vpop.f32.mrf.mxu0
      %v1292 = vadd.f32 %v1194, %v1291
      %v1293 = vpop.f32.mrf.mxu0
      %1294 = vmatprep.mubr.f32.mxu0 0.0
      %v1295 = vand.u32 %v899, 4294901760
      %v1296 = vsub.f32 %v899, %v1295
      %v1297 = vand.u32 %v1296, 4294901760
      %1298 = vmatmul.mubr.f32.gmra.mxu0 %v1297
      %v1299 = vpop.f32.mrf.mxu0
      %v1300 = vadd.f32 %v1201, %v1299
      %v1301 = vpop.f32.mrf.mxu0
      %1302 = vdwg.mxu0
      %1303 = vmatprep.subr.mxu0 0.0
      %1304 = vmatpush1.xpose.msra.mxu0 0.0
      %1305 = vmatprep.subr.mxu0 0.0
      %1306 = vmatpush1.xpose.msra.mxu0 0.0
      %1307 = vmatprep.subr.mxu0 0.0
      %1308 = vmatpush1.xpose.msra.mxu0 0.0
      %1309 = vmatprep.subr.mxu0 0.0
      %1310 = vmatpush1.xpose.msra.mxu0 0.0
      %1311 = vmatprep.subr.mxu0 0.0
      %1312 = vmatpush1.xpose.msra.mxu0 0.0
      %1313 = vmatprep.subr.mxu0 0.0
      %1314 = vmatpush1.xpose.msra.mxu0 0.0
      %1315 = vmatprep.subr.mxu0 0.0
      %1316 = vmatpush1.xpose.msra.mxu0 0.0
      %1317 = vmatprep.subr.mxu0 0.0
      %1318 = vmatpush1.xpose.msra.mxu0 0.0
      %1319 = vmatprep.subr.mxu0 0.0
      %1320 = vmatpush1.xpose.msra.mxu0 0.0
      %1321 = vmatprep.subr.mxu0 0.0
      %1322 = vmatpush1.xpose.msra.mxu0 0.0
      %1323 = vmatprep.subr.mxu0 0.0
      %1324 = vmatpush1.xpose.msra.mxu0 0.0
      %1325 = vmatprep.subr.mxu0 0.0
      %1326 = vmatpush1.xpose.msra.mxu0 0.0
      %1327 = vmatprep.subr.mxu0 0.0
      %1328 = vmatpush1.xpose.msra.mxu0 0.0
      %1329 = vmatprep.subr.mxu0 0.0
      %1330 = vmatpush1.xpose.msra.mxu0 0.0
      %1331 = vmatprep.subr.mxu0 0.0
      %v1332 = vand.u32 %v257, 4294901760
      %v1333 = vsub.f32 %v257, %v1332
      %v1334 = vand.u32 %v1333, 4294901760
      %1335 = vmatpush1.xpose.msra.mxu0 %v1334
      %1336 = vmatprep.subr.mxu0 0.0
      %v1337 = vand.u32 %v254, 4294901760
      %v1338 = vsub.f32 %v254, %v1337
      %v1339 = vand.u32 %v1338, 4294901760
      %1340 = vmatpush1.xpose.msra.mxu0 %v1339
      %1341 = vmatprep.subr.mxu0 0.0
      %1342 = vmatpush2.xpose.msra.mxu0 0.0
      %1343 = vmatprep.subr.mxu0 0.0
      %1344 = vmatpush2.xpose.msra.mxu0 0.0
      %1345 = vmatprep.subr.mxu0 0.0
      %1346 = vmatpush2.xpose.msra.mxu0 0.0
      %1347 = vmatprep.subr.mxu0 0.0
      %1348 = vmatpush2.xpose.msra.mxu0 0.0
      %1349 = vmatprep.subr.mxu0 0.0
      %1350 = vmatpush2.xpose.msra.mxu0 0.0
      %1351 = vmatprep.subr.mxu0 0.0
      %1352 = vmatpush2.xpose.msra.mxu0 0.0
      %1353 = vmatprep.subr.mxu0 0.0
      %1354 = vmatpush2.xpose.msra.mxu0 0.0
      %1355 = vmatprep.subr.mxu0 0.0
      %1356 = vmatpush2.xpose.msra.mxu0 0.0
      %1357 = vmatprep.subr.mxu0 0.0
      %1358 = vmatpush2.xpose.msra.mxu0 0.0
      %1359 = vmatprep.subr.mxu0 0.0
      %1360 = vmatpush2.xpose.msra.mxu0 0.0
      %1361 = vmatprep.subr.mxu0 0.0
      %1362 = vmatpush2.xpose.msra.mxu0 0.0
      %1363 = vmatprep.subr.mxu0 0.0
      %1364 = vmatpush2.xpose.msra.mxu0 0.0
      %1365 = vmatprep.subr.mxu0 0.0
      %1366 = vmatpush2.xpose.msra.mxu0 0.0
      %1367 = vmatprep.subr.mxu0 0.0
      %1368 = vmatpush2.xpose.msra.mxu0 0.0
      %1369 = vmatprep.subr.mxu0 0.0
      %1370 = vmatpush2.xpose.msra.mxu0 0.0
      %1371 = vmatprep.subr.mxu0 0.0
      %1372 = vmatpush2.xpose.msra.mxu0 0.0
      %1373 = vmatprep.mubr.f32.mxu0 0.0
      %v1374 = vand.u32 %v890, 4294901760
      %1375 = vmatmul.mubr.f32.gmra.mxu0 %v1374
      %v1376 = vpop.f32.mrf.mxu0
      %v1377 = vadd.f32 %v1276, %v1376
      %v1378 = vpop.f32.mrf.mxu0
      %1379 = vmatprep.mubr.f32.mxu0 0.0
      %v1380 = vand.u32 %v893, 4294901760
      %1381 = vmatmul.mubr.f32.gmra.mxu0 %v1380
      %v1382 = vpop.f32.mrf.mxu0
      %v1383 = vadd.f32 %v1284, %v1382
      %v1384 = vpop.f32.mrf.mxu0
      %1385 = vmatprep.mubr.f32.mxu0 0.0
      %v1386 = vand.u32 %v896, 4294901760
      %1387 = vmatmul.mubr.f32.gmra.mxu0 %v1386
      %v1388 = vpop.f32.mrf.mxu0
      %v1389 = vadd.f32 %v1292, %v1388
      %v1390 = vpop.f32.mrf.mxu0
      %1391 = vmatprep.mubr.f32.mxu0 0.0
      %v1392 = vand.u32 %v899, 4294901760
      %1393 = vmatmul.mubr.f32.gmra.mxu0 %v1392
      %v1394 = vpop.f32.mrf.mxu0
      %v1395 = vadd.f32 %v1300, %v1394
      %v1396 = vpop.f32.mrf.mxu0
      %1397 = vdwg.mxu0
      %1398 = vmatprep.subr.mxu0 0.0
      %1399 = vmatpush1.xpose.msra.mxu0 0.0
      %1400 = vmatprep.subr.mxu0 0.0
      %1401 = vmatpush1.xpose.msra.mxu0 0.0
      %1402 = vmatprep.subr.mxu0 0.0
      %1403 = vmatpush1.xpose.msra.mxu0 0.0
      %1404 = vmatprep.subr.mxu0 0.0
      %1405 = vmatpush1.xpose.msra.mxu0 0.0
      %1406 = vmatprep.subr.mxu0 0.0
      %1407 = vmatpush1.xpose.msra.mxu0 0.0
      %1408 = vmatprep.subr.mxu0 0.0
      %1409 = vmatpush1.xpose.msra.mxu0 0.0
      %1410 = vmatprep.subr.mxu0 0.0
      %1411 = vmatpush1.xpose.msra.mxu0 0.0
      %1412 = vmatprep.subr.mxu0 0.0
      %1413 = vmatpush1.xpose.msra.mxu0 0.0
      %1414 = vmatprep.subr.mxu0 0.0
      %1415 = vmatpush1.xpose.msra.mxu0 0.0
      %1416 = vmatprep.subr.mxu0 0.0
      %1417 = vmatpush1.xpose.msra.mxu0 0.0
      %1418 = vmatprep.subr.mxu0 0.0
      %1419 = vmatpush1.xpose.msra.mxu0 0.0
      %1420 = vmatprep.subr.mxu0 0.0
      %1421 = vmatpush1.xpose.msra.mxu0 0.0
      %1422 = vmatprep.subr.mxu0 0.0
      %1423 = vmatpush1.xpose.msra.mxu0 0.0
      %1424 = vmatprep.subr.mxu0 0.0
      %1425 = vmatpush1.xpose.msra.mxu0 0.0
      %1426 = vmatprep.subr.mxu0 0.0
      %v1427 = vand.u32 %v257, 4294901760
      %1428 = vmatpush1.xpose.msra.mxu0 %v1427
      %1429 = vmatprep.subr.mxu0 0.0
      %v1430 = vand.u32 %v254, 4294901760
      %1431 = vmatpush1.xpose.msra.mxu0 %v1430
      %1432 = vmatprep.subr.mxu0 0.0
      %1433 = vmatpush2.xpose.msra.mxu0 0.0
      %1434 = vmatprep.subr.mxu0 0.0
      %1435 = vmatpush2.xpose.msra.mxu0 0.0
      %1436 = vmatprep.subr.mxu0 0.0
      %1437 = vmatpush2.xpose.msra.mxu0 0.0
      %1438 = vmatprep.subr.mxu0 0.0
      %1439 = vmatpush2.xpose.msra.mxu0 0.0
      %1440 = vmatprep.subr.mxu0 0.0
      %1441 = vmatpush2.xpose.msra.mxu0 0.0
      %1442 = vmatprep.subr.mxu0 0.0
      %1443 = vmatpush2.xpose.msra.mxu0 0.0
      %1444 = vmatprep.subr.mxu0 0.0
      %1445 = vmatpush2.xpose.msra.mxu0 0.0
      %1446 = vmatprep.subr.mxu0 0.0
      %1447 = vmatpush2.xpose.msra.mxu0 0.0
      %1448 = vmatprep.subr.mxu0 0.0
      %1449 = vmatpush2.xpose.msra.mxu0 0.0
      %1450 = vmatprep.subr.mxu0 0.0
      %1451 = vmatpush2.xpose.msra.mxu0 0.0
      %1452 = vmatprep.subr.mxu0 0.0
      %1453 = vmatpush2.xpose.msra.mxu0 0.0
      %1454 = vmatprep.subr.mxu0 0.0
      %1455 = vmatpush2.xpose.msra.mxu0 0.0
      %1456 = vmatprep.subr.mxu0 0.0
      %1457 = vmatpush2.xpose.msra.mxu0 0.0
      %1458 = vmatprep.subr.mxu0 0.0
      %1459 = vmatpush2.xpose.msra.mxu0 0.0
      %1460 = vmatprep.subr.mxu0 0.0
      %1461 = vmatpush2.xpose.msra.mxu0 0.0
      %1462 = vmatprep.subr.mxu0 0.0
      %1463 = vmatpush2.xpose.msra.mxu0 0.0
      %1464 = vmatprep.mubr.f32.mxu0 0.0
      %v1465 = vand.u32 %v890, 4294901760
      %1466 = vmatmul.mubr.f32.gmra.mxu0 %v1465
      %v1467 = vpop.f32.mrf.mxu0
      %v1468 = vadd.f32 %v1377, %v1467
      %v1469 = vpop.f32.mrf.mxu0
      %1470 = vmatprep.mubr.f32.mxu0 0.0
      %v1471 = vand.u32 %v893, 4294901760
      %1472 = vmatmul.mubr.f32.gmra.mxu0 %v1471
      %v1473 = vpop.f32.mrf.mxu0
      %v1474 = vadd.f32 %v1383, %v1473
      %v1475 = vpop.f32.mrf.mxu0
      %1476 = vmatprep.mubr.f32.mxu0 0.0
      %v1477 = vand.u32 %v896, 4294901760
      %1478 = vmatmul.mubr.f32.gmra.mxu0 %v1477
      %v1479 = vpop.f32.mrf.mxu0
      %v1480 = vadd.f32 %v1389, %v1479
      %v1481 = vpop.f32.mrf.mxu0
      %1482 = vmatprep.mubr.f32.mxu0 0.0
      %v1483 = vand.u32 %v899, 4294901760
      %1484 = vmatmul.mubr.f32.gmra.mxu0 %v1483
      %v1485 = vpop.f32.mrf.mxu0
      %v1486 = vadd.f32 %v1395, %v1485
      %v1487 = vpop.f32.mrf.mxu0
      %1488 = vdwg.mxu0
      %v1489 = vmax.f32 %v1468, 0.0
      %v1490 = vmax.f32 %v1474, 0.0
      %v1491 = vmax.f32 %v1480, 0.0
      %v1492 = vmax.f32 %v1486, 0.0
      %1493 = vst.msk [vmem:[%s229] sm:$0xff] %vm884, %v1489
      %1494 = vst.msk [vmem:[%s229 + $0x8] sm:$0xff] %vm884, %v1490
      %1495 = vst.msk [vmem:[%s229 + $0x10] sm:$0xff] %vm884, %v1491
      %1496 = vst.msk [vmem:[%s229 + $0x18] sm:$0xff] %vm884, %v1492
      %p1497 = scmp.lt.s32.totalorder %s19, 1
      %s1498 = scalar_select %p1497, %s19, 1
      %s1499 = smul.addr %s1498, 4
      %s1500 = smul.addr %s1499, 8
      %s1501 = scalar_lea.vmem %s4, %s1500
      // Predicated region
      $region37: #{tpu_custom_call.1} parent=35 // pred_check
        %p1502 = pneg %p139
      $region38: #{tpu_custom_call.1} parent=35 // pred_check_branch
        %1504 = sbr.rel (%p1502) target = $region40
      $region39: #{tpu_custom_call.1} parent=35 // pred_region
        _
      $region40: #{tpu_custom_call.1} parent=35 // pred_fallthru
        _
    $region36: #{tpu_custom_call.1} parent=5 // pred_fallthru
      _
    %p1505 = scmp.le.s32.totalorder 2, %s10
    // Predicated region
    $region41: #{tpu_custom_call.1} parent=5 // pred_check
      %p1506 = pneg %p1505
    $region42: #{tpu_custom_call.1} parent=5 // pred_check_branch
      %1508 = sbr.rel (%p1506) target = $region44
    $region43: #{tpu_custom_call.1} parent=5 // pred_region
      %s1509 = ssub.s32 %s10, 2
      // Predicated region
      $region45: #{tpu_custom_call.1} parent=43 // pred_check
        %p1510 = pneg %p145
      $region46: #{tpu_custom_call.1} parent=43 // pred_check_branch
        %1512 = sbr.rel (%p1510) target = $region48
      $region47: #{tpu_custom_call.1} parent=43 // pred_region
        %p1513 = scmp.lt.s32.totalorder %s21, 1
        %s1514 = scalar_select %p1513, %s21, 1
        %s1515 = smul.addr %s1514, 4
        %s1516 = smul.addr %s1515, 8
        %s1517 = scalar_lea.vmem %s4, %s1516
      $region48: #{tpu_custom_call.1} parent=43 // pred_fallthru
        _
    $region44: #{tpu_custom_call.1} parent=5 // pred_fallthru
      _
  $region6: #{tpu_custom_call.1} parent=0 // loop_footer
    %s14 = sadd.s32 1, %s10
  $region7: #{tpu_custom_call.1} parent=0 // loop_footer_branch
    %9 = sbr.rel target = $region3
  $region8: #{tpu_custom_call.1} parent=0 // loop_exit
    _

</llo_original>
